<compile_context>
chip_gen: v5e
topology: v5e:2x2
jax: 0.10.0
libtpu: 0.0.40
codegen_flags: <defaults>
</compile_context>

<pallas_src>
import numpy as np
import jax
import jax.numpy as jnp
from jax.experimental import pallas as pl
from jax.experimental.pallas import tpu as pltpu

# Flat-index geometry (28x28 input, 5x5 valid convs, 2x2/2 pools).
IMG = 28                   # input height / width
C1_LEN = 28 * 23 + 24      # 668: conv1 flat length (stride 28, valid m = 28*oh + ow)
P1_M4 = C1_LEN - 29        # 639: pool1 max-of-4 needs m, m+1, m+28, m+29
P1_OUT = 12 * 12           # 144: pooled1 flat length (stride 12)
C2_LEN = 12 * 7 + 8        # 92:  conv2 flat length (stride 12, valid m = 12*oh + ow)
P2_M4 = C2_LEN - 13        # 79:  pool2 max-of-4 needs m, m+1, m+12, m+13
FEAT = 16 * 4 * 4          # 256


# ---------------------------------------------------------------------------
# The single fused kernel (one image per grid step).
# ---------------------------------------------------------------------------
def _lenet_kernel(x_ref, w1_ref, b1_ref, s1_ref, w2_ref, b2_ref, s2_ref,
                  cmask_ref, l1w_ref, l1b_ref, l2w_ref, l2b_ref, l3w_ref,
                  l3b_ref, o_ref, p1_ref, p2_ref):
    f32 = jnp.float32

    # ---- conv1: in-kernel im2col (rows ordered (kh, kw)), transposed matmul ----
    for kh in range(5):
        for kw in range(5):
            r = kh * 5 + kw
            off = IMG * kh + kw
            p1_ref[r:r + 1, :] = x_ref[0, :, off:off + C1_LEN]
    a1 = jnp.dot(w1_ref[...], p1_ref[...], preferred_element_type=f32)      # (6, 668)
    a1 = jnp.maximum(a1 + b1_ref[...], 0.0)

    # ---- maxpool 2x2: max of 4 shifts (VPU) + stride-2 selection matmul (MXU) ----
    m4 = jnp.maximum(jnp.maximum(a1[:, 0:P1_M4], a1[:, 1:P1_M4 + 1]),
                     jnp.maximum(a1[:, 28:28 + P1_M4], a1[:, 29:29 + P1_M4]))
    a1p = jnp.dot(m4, s1_ref[...], preferred_element_type=f32)              # (6, 144)

    # ---- conv2: in-kernel im2col (rows ordered (kh, kw, c)), transposed matmul ----
    for kh in range(5):
        for kw in range(5):
            r = kh * 5 + kw
            off = 12 * kh + kw
            p2_ref[6 * r:6 * (r + 1), :] = a1p[:, off:off + C2_LEN]
    a2 = jnp.dot(w2_ref[...], p2_ref[...], preferred_element_type=f32)      # (16, 92)
    a2 = jnp.maximum(a2 + b2_ref[...], 0.0)

    # ---- maxpool 2x2 + torch-order (.view) flatten via channel mask ----
    m4b = jnp.maximum(jnp.maximum(a2[:, 0:P2_M4], a2[:, 1:P2_M4 + 1]),
                      jnp.maximum(a2[:, 12:12 + P2_M4], a2[:, 13:13 + P2_M4]))
    fbig = jnp.dot(m4b, s2_ref[...], preferred_element_type=f32)            # (16, 256)
    feat = jnp.sum(fbig * cmask_ref[...], axis=0, keepdims=True)            # (1, 256)

    # ---- fc1 -> relu -> fc2 -> relu -> fc3 (all VMEM resident) ----
    h = jnp.maximum(jnp.dot(feat, l1w_ref[...], preferred_element_type=f32)
                    + l1b_ref[...], 0.0)                                    # (1, 120)
    h = jnp.maximum(jnp.dot(h, l2w_ref[...], preferred_element_type=f32)
                    + l2b_ref[...], 0.0)                                    # (1, 84)
    o_ref[0, :, :] = jnp.dot(h, l3w_ref[...], preferred_element_type=f32) + l3b_ref[...]


# ---------------------------------------------------------------------------
# Host-side constant matrices (pool selection / channel mask), built once.
# ---------------------------------------------------------------------------
def _pool1_select():
    # Column p = 12*ph + pw selects flat index m = 28*(2*ph) + 2*pw of the max-of-4 map.
    s = np.zeros((P1_M4, P1_OUT), np.float32)
    for ph in range(12):
        for pw in range(12):
            s[56 * ph + 2 * pw, 12 * ph + pw] = 1.0
    return s


def _pool2_flatten_select():
    # Column f = 16*c + 4*ph + pw selects flat index m = 12*(2*ph) + 2*pw (same for every
    # channel c; the channel itself is picked afterwards by the channel mask).
    s = np.zeros((P2_M4, FEAT), np.float32)
    for c in range(16):
        for ph in range(4):
            for pw in range(4):
                s[24 * ph + 2 * pw, 16 * c + 4 * ph + pw] = 1.0
    return s


def _channel_mask():
    # mask[c, f] = 1 where feature f belongs to channel c (torch .view order f = 16*c + s).
    return (np.arange(FEAT)[None, :] // 16 == np.arange(16)[:, None]).astype(np.float32)


# ---------------------------------------------------------------------------
# Parameters (PyTorch-convention shapes) + one-time repack into kernel layouts.
# ---------------------------------------------------------------------------
def init_params(key):
    ks = jax.random.split(key, 10)

    def u(k, shape, fan_in):
        bound = 1.0 / float(fan_in) ** 0.5
        return jax.random.uniform(k, shape, jnp.float32, -bound, bound)

    return {
        "c1_w": u(ks[0], (6, 1, 5, 5), 25), "c1_b": u(ks[1], (6,), 25),
        "c2_w": u(ks[2], (16, 6, 5, 5), 150), "c2_b": u(ks[3], (16,), 150),
        "l1_w": u(ks[4], (120, 256), 256), "l1_b": u(ks[5], (120,), 256),
        "l2_w": u(ks[6], (84, 120), 120), "l2_b": u(ks[7], (84,), 120),
        "l3_w": u(ks[8], (10, 84), 84), "l3_b": u(ks[9], (10,), 84),
    }


def prepare_params(p):
    """One-time host-side repack into the kernel's VMEM-friendly layouts."""
    return {
        "w1": p["c1_w"].reshape(6, 25),                                  # rows (kh, kw)
        "b1": p["c1_b"].reshape(6, 1),
        "w2": jnp.transpose(p["c2_w"], (0, 2, 3, 1)).reshape(16, 150),   # rows (kh, kw, c)
        "b2": p["c2_b"].reshape(16, 1),
        "s1": jnp.asarray(_pool1_select()),
        "s2": jnp.asarray(_pool2_flatten_select()),
        "cmask": jnp.asarray(_channel_mask()),
        "l1w": p["l1_w"].T, "l1b": p["l1_b"].reshape(1, 120),
        "l2w": p["l2_w"].T, "l2b": p["l2_b"].reshape(1, 84),
        "l3w": p["l3_w"].T, "l3b": p["l3_b"].reshape(1, 10),
    }


# ---------------------------------------------------------------------------
# Forward pass: one fused pallas_call.
# ---------------------------------------------------------------------------
def _resident(shape):
    # Full-array block with a constant block index -> DMA'd once, VMEM resident
    # across all grid steps.
    zeros = (0,) * len(shape)
    return pl.BlockSpec(shape, lambda b: zeros)


def lenet_forward(kp, x):
    B = x.shape[0]
    assert x.shape[1:] == (1, IMG, IMG), x.shape
    xflat = x.astype(jnp.float32).reshape(B, 1, IMG * IMG)

    out = pl.pallas_call(
        _lenet_kernel,
        out_shape=jax.ShapeDtypeStruct((B, 1, 10), jnp.float32),
        grid=(B,),
        in_specs=[
            pl.BlockSpec((1, 1, IMG * IMG), lambda b: (b, 0, 0)),   # one image per step
            _resident((6, 25)), _resident((6, 1)),
            _resident((P1_M4, P1_OUT)),
            _resident((16, 150)), _resident((16, 1)),
            _resident((P2_M4, FEAT)), _resident((16, FEAT)),
            _resident((256, 120)), _resident((1, 120)),
            _resident((120, 84)), _resident((1, 84)),
            _resident((84, 10)), _resident((1, 10)),
        ],
        out_specs=pl.BlockSpec((1, 1, 10), lambda b: (b, 0, 0)),
        scratch_shapes=[
            pltpu.VMEM((25, C1_LEN), jnp.float32),    # conv1 im2col patches
            pltpu.VMEM((150, C2_LEN), jnp.float32),   # conv2 im2col patches
        ],
        compiler_params=pltpu.CompilerParams(
            dimension_semantics=("parallel",),        # v7x: both TensorCores take batch slices
        ),
    )(xflat, kp["w1"], kp["b1"], kp["s1"], kp["w2"], kp["b2"], kp["s2"],
      kp["cmask"], kp["l1w"], kp["l1b"], kp["l2w"], kp["l2b"], kp["l3w"], kp["l3b"])
    return out.reshape(B, 10)


# ---------------------------------------------------------------------------
# Plain-XLA reference (validation only).
# ---------------------------------------------------------------------------
def reference_forward(p, x):
    def conv(y, w, b):
        y = jax.lax.conv_general_dilated(
            y, w, window_strides=(1, 1), padding="VALID",
            dimension_numbers=("NCHW", "OIHW", "NCHW"))
        return jax.nn.relu(y + b[None, :, None, None])

    def pool(y):
        return jax.lax.reduce_window(y, -jnp.inf, jax.lax.max,
                                     (1, 1, 2, 2), (1, 1, 2, 2), "VALID")

    y = pool(conv(x, p["c1_w"], p["c1_b"]))
    y = pool(conv(y, p["c2_w"], p["c2_b"]))
    y = y.reshape(y.shape[0], -1)
    y = jax.nn.relu(y @ p["l1_w"].T + p["l1_b"])
    y = jax.nn.relu(y @ p["l2_w"].T + p["l2_b"])
    return y @ p["l3_w"].T + p["l3_b"]


if __name__ == "__main__":
    key = jax.random.PRNGKey(0)
    pkey, xkey = jax.random.split(key)
    params = init_params(pkey)
    kparams = prepare_params(params)
    x = jax.random.normal(xkey, (2, 1, 28, 28), dtype=jnp.float32)

    fwd = jax.jit(lenet_forward)
    out = jax.block_until_ready(fwd(kparams, x))

    assert out.shape == (2, 10), out.shape
    assert out.dtype == jnp.float32
    assert bool(jnp.all(jnp.isfinite(out)))

    # Cross-check against the plain-XLA reference (loose tol: MXU may use bf16 passes).
    ref = reference_forward(params, x)
    assert bool(jnp.allclose(out, ref, rtol=5e-2, atol=5e-2)), (out, ref)

    print("KERNEL_OK")
</pallas_src>

<mosaic_0001>
module attributes {stable_mosaic.version = 11 : i64} {
  func.func @_lenet_kernel(%arg0: i32, %arg1: memref<1x1x784xf32, #tpu.memory_space<vmem>>, %arg2: memref<6x25xf32, #tpu.memory_space<vmem>>, %arg3: memref<6x1xf32, #tpu.memory_space<vmem>>, %arg4: memref<639x144xf32, #tpu.memory_space<vmem>>, %arg5: memref<16x150xf32, #tpu.memory_space<vmem>>, %arg6: memref<16x1xf32, #tpu.memory_space<vmem>>, %arg7: memref<79x256xf32, #tpu.memory_space<vmem>>, %arg8: memref<16x256xf32, #tpu.memory_space<vmem>>, %arg9: memref<256x120xf32, #tpu.memory_space<vmem>>, %arg10: memref<1x120xf32, #tpu.memory_space<vmem>>, %arg11: memref<120x84xf32, #tpu.memory_space<vmem>>, %arg12: memref<1x84xf32, #tpu.memory_space<vmem>>, %arg13: memref<84x10xf32, #tpu.memory_space<vmem>>, %arg14: memref<1x10xf32, #tpu.memory_space<vmem>>, %arg15: memref<1x1x10xf32, #tpu.memory_space<vmem>>, %arg16: memref<25x668xf32, #tpu.memory_space<vmem>>, %arg17: memref<150x92xf32, #tpu.memory_space<vmem>>) attributes {dimension_semantics = [#tpu.dimension_semantics<parallel>], iteration_bounds = array<i64: 2>, scalar_prefetch = 0 : i64, scratch_operands = 2 : i64, tpu.core_type = #tpu.core_type<tc>, window_params = [{transform_indices = @transform_0, window_bounds = array<i64: 1, 1, 784>}, {pipeline_mode = #tpu.pipeline_mode<synchronous>, transform_indices = @transform_1, window_bounds = array<i64: 6, 25>}, {pipeline_mode = #tpu.pipeline_mode<synchronous>, transform_indices = @transform_2, window_bounds = array<i64: 6, 1>}, {pipeline_mode = #tpu.pipeline_mode<synchronous>, transform_indices = @transform_3, window_bounds = array<i64: 639, 144>}, {pipeline_mode = #tpu.pipeline_mode<synchronous>, transform_indices = @transform_4, window_bounds = array<i64: 16, 150>}, {pipeline_mode = #tpu.pipeline_mode<synchronous>, transform_indices = @transform_5, window_bounds = array<i64: 16, 1>}, {pipeline_mode = #tpu.pipeline_mode<synchronous>, transform_indices = @transform_6, window_bounds = array<i64: 79, 256>}, {pipeline_mode = #tpu.pipeline_mode<synchronous>, transform_indices = @transform_7, window_bounds = array<i64: 16, 256>}, {pipeline_mode = #tpu.pipeline_mode<synchronous>, transform_indices = @transform_8, window_bounds = array<i64: 256, 120>}, {pipeline_mode = #tpu.pipeline_mode<synchronous>, transform_indices = @transform_9, window_bounds = array<i64: 1, 120>}, {pipeline_mode = #tpu.pipeline_mode<synchronous>, transform_indices = @transform_10, window_bounds = array<i64: 120, 84>}, {pipeline_mode = #tpu.pipeline_mode<synchronous>, transform_indices = @transform_11, window_bounds = array<i64: 1, 84>}, {pipeline_mode = #tpu.pipeline_mode<synchronous>, transform_indices = @transform_12, window_bounds = array<i64: 84, 10>}, {pipeline_mode = #tpu.pipeline_mode<synchronous>, transform_indices = @transform_13, window_bounds = array<i64: 1, 10>}, {transform_indices = @transform_14, window_bounds = array<i64: 1, 1, 10>}]} {
    %c0 = arith.constant 0 : index
    %c0_0 = arith.constant 0 : index
    %c0_1 = arith.constant 0 : index
    %0 = vector.load %arg1[%c0, %c0_0, %c0_1] : memref<1x1x784xf32, #tpu.memory_space<vmem>>, vector<1x1x668xf32>
    %1 = vector.shape_cast %0 : vector<1x1x668xf32> to vector<1x668xf32>
    %c0_2 = arith.constant 0 : index
    %c0_3 = arith.constant 0 : index
    %2 = vector.load %arg16[%c0_2, %c0_3] : memref<25x668xf32, #tpu.memory_space<vmem>>, vector<1x668xf32>
    tpu.vector_store %arg16[%c0_2, %c0_3], %1 {strides = array<i32>} : memref<25x668xf32, #tpu.memory_space<vmem>>, vector<1x668xf32>,
    %c0_4 = arith.constant 0 : index
    %c0_5 = arith.constant 0 : index
    %c1 = arith.constant 1 : index
    %3 = vector.load %arg1[%c0_4, %c0_5, %c1] : memref<1x1x784xf32, #tpu.memory_space<vmem>>, vector<1x1x668xf32>
    %4 = vector.shape_cast %3 : vector<1x1x668xf32> to vector<1x668xf32>
    %c1_6 = arith.constant 1 : index
    %c0_7 = arith.constant 0 : index
    %5 = vector.load %arg16[%c1_6, %c0_7] : memref<25x668xf32, #tpu.memory_space<vmem>>, vector<1x668xf32>
    tpu.vector_store %arg16[%c1_6, %c0_7], %4 {strides = array<i32>} : memref<25x668xf32, #tpu.memory_space<vmem>>, vector<1x668xf32>,
    %c0_8 = arith.constant 0 : index
    %c0_9 = arith.constant 0 : index
    %c2 = arith.constant 2 : index
    %6 = vector.load %arg1[%c0_8, %c0_9, %c2] : memref<1x1x784xf32, #tpu.memory_space<vmem>>, vector<1x1x668xf32>
    %7 = vector.shape_cast %6 : vector<1x1x668xf32> to vector<1x668xf32>
    %c2_10 = arith.constant 2 : index
    %c0_11 = arith.constant 0 : index
    %8 = vector.load %arg16[%c2_10, %c0_11] : memref<25x668xf32, #tpu.memory_space<vmem>>, vector<1x668xf32>
    tpu.vector_store %arg16[%c2_10, %c0_11], %7 {strides = array<i32>} : memref<25x668xf32, #tpu.memory_space<vmem>>, vector<1x668xf32>,
    %c0_12 = arith.constant 0 : index
    %c0_13 = arith.constant 0 : index
    %c3 = arith.constant 3 : index
    %9 = vector.load %arg1[%c0_12, %c0_13, %c3] : memref<1x1x784xf32, #tpu.memory_space<vmem>>, vector<1x1x668xf32>
    %10 = vector.shape_cast %9 : vector<1x1x668xf32> to vector<1x668xf32>
    %c3_14 = arith.constant 3 : index
    %c0_15 = arith.constant 0 : index
    %11 = vector.load %arg16[%c3_14, %c0_15] : memref<25x668xf32, #tpu.memory_space<vmem>>, vector<1x668xf32>
    tpu.vector_store %arg16[%c3_14, %c0_15], %10 {strides = array<i32>} : memref<25x668xf32, #tpu.memory_space<vmem>>, vector<1x668xf32>,
    %c0_16 = arith.constant 0 : index
    %c0_17 = arith.constant 0 : index
    %c4 = arith.constant 4 : index
    %12 = vector.load %arg1[%c0_16, %c0_17, %c4] : memref<1x1x784xf32, #tpu.memory_space<vmem>>, vector<1x1x668xf32>
    %13 = vector.shape_cast %12 : vector<1x1x668xf32> to vector<1x668xf32>
    %c4_18 = arith.constant 4 : index
    %c0_19 = arith.constant 0 : index
    %14 = vector.load %arg16[%c4_18, %c0_19] : memref<25x668xf32, #tpu.memory_space<vmem>>, vector<1x668xf32>
    tpu.vector_store %arg16[%c4_18, %c0_19], %13 {strides = array<i32>} : memref<25x668xf32, #tpu.memory_space<vmem>>, vector<1x668xf32>,
    %c0_20 = arith.constant 0 : index
    %c0_21 = arith.constant 0 : index
    %c28 = arith.constant 28 : index
    %15 = vector.load %arg1[%c0_20, %c0_21, %c28] : memref<1x1x784xf32, #tpu.memory_space<vmem>>, vector<1x1x668xf32>
    %16 = vector.shape_cast %15 : vector<1x1x668xf32> to vector<1x668xf32>
    %c5 = arith.constant 5 : index
    %c0_22 = arith.constant 0 : index
    %17 = vector.load %arg16[%c5, %c0_22] : memref<25x668xf32, #tpu.memory_space<vmem>>, vector<1x668xf32>
    tpu.vector_store %arg16[%c5, %c0_22], %16 {strides = array<i32>} : memref<25x668xf32, #tpu.memory_space<vmem>>, vector<1x668xf32>,
    %c0_23 = arith.constant 0 : index
    %c0_24 = arith.constant 0 : index
    %c29 = arith.constant 29 : index
    %18 = vector.load %arg1[%c0_23, %c0_24, %c29] : memref<1x1x784xf32, #tpu.memory_space<vmem>>, vector<1x1x668xf32>
    %19 = vector.shape_cast %18 : vector<1x1x668xf32> to vector<1x668xf32>
    %c6 = arith.constant 6 : index
    %c0_25 = arith.constant 0 : index
    %20 = vector.load %arg16[%c6, %c0_25] : memref<25x668xf32, #tpu.memory_space<vmem>>, vector<1x668xf32>
    tpu.vector_store %arg16[%c6, %c0_25], %19 {strides = array<i32>} : memref<25x668xf32, #tpu.memory_space<vmem>>, vector<1x668xf32>,
    %c0_26 = arith.constant 0 : index
    %c0_27 = arith.constant 0 : index
    %c30 = arith.constant 30 : index
    %21 = vector.load %arg1[%c0_26, %c0_27, %c30] : memref<1x1x784xf32, #tpu.memory_space<vmem>>, vector<1x1x668xf32>
    %22 = vector.shape_cast %21 : vector<1x1x668xf32> to vector<1x668xf32>
    %c7 = arith.constant 7 : index
    %c0_28 = arith.constant 0 : index
    %23 = vector.load %arg16[%c7, %c0_28] : memref<25x668xf32, #tpu.memory_space<vmem>>, vector<1x668xf32>
    tpu.vector_store %arg16[%c7, %c0_28], %22 {strides = array<i32>} : memref<25x668xf32, #tpu.memory_space<vmem>>, vector<1x668xf32>,
    %c0_29 = arith.constant 0 : index
    %c0_30 = arith.constant 0 : index
    %c31 = arith.constant 31 : index
    %24 = vector.load %arg1[%c0_29, %c0_30, %c31] : memref<1x1x784xf32, #tpu.memory_space<vmem>>, vector<1x1x668xf32>
    %25 = vector.shape_cast %24 : vector<1x1x668xf32> to vector<1x668xf32>
    %c8 = arith.constant 8 : index
    %c0_31 = arith.constant 0 : index
    %26 = vector.load %arg16[%c8, %c0_31] : memref<25x668xf32, #tpu.memory_space<vmem>>, vector<1x668xf32>
    tpu.vector_store %arg16[%c8, %c0_31], %25 {strides = array<i32>} : memref<25x668xf32, #tpu.memory_space<vmem>>, vector<1x668xf32>,
    %c0_32 = arith.constant 0 : index
    %c0_33 = arith.constant 0 : index
    %c32 = arith.constant 32 : index
    %27 = vector.load %arg1[%c0_32, %c0_33, %c32] : memref<1x1x784xf32, #tpu.memory_space<vmem>>, vector<1x1x668xf32>
    %28 = vector.shape_cast %27 : vector<1x1x668xf32> to vector<1x668xf32>
    %c9 = arith.constant 9 : index
    %c0_34 = arith.constant 0 : index
    %29 = vector.load %arg16[%c9, %c0_34] : memref<25x668xf32, #tpu.memory_space<vmem>>, vector<1x668xf32>
    tpu.vector_store %arg16[%c9, %c0_34], %28 {strides = array<i32>} : memref<25x668xf32, #tpu.memory_space<vmem>>, vector<1x668xf32>,
    %c0_35 = arith.constant 0 : index
    %c0_36 = arith.constant 0 : index
    %c56 = arith.constant 56 : index
    %30 = vector.load %arg1[%c0_35, %c0_36, %c56] : memref<1x1x784xf32, #tpu.memory_space<vmem>>, vector<1x1x668xf32>
    %31 = vector.shape_cast %30 : vector<1x1x668xf32> to vector<1x668xf32>
    %c10 = arith.constant 10 : index
    %c0_37 = arith.constant 0 : index
    %32 = vector.load %arg16[%c10, %c0_37] : memref<25x668xf32, #tpu.memory_space<vmem>>, vector<1x668xf32>
    tpu.vector_store %arg16[%c10, %c0_37], %31 {strides = array<i32>} : memref<25x668xf32, #tpu.memory_space<vmem>>, vector<1x668xf32>,
    %c0_38 = arith.constant 0 : index
    %c0_39 = arith.constant 0 : index
    %c57 = arith.constant 57 : index
    %33 = vector.load %arg1[%c0_38, %c0_39, %c57] : memref<1x1x784xf32, #tpu.memory_space<vmem>>, vector<1x1x668xf32>
    %34 = vector.shape_cast %33 : vector<1x1x668xf32> to vector<1x668xf32>
    %c11 = arith.constant 11 : index
    %c0_40 = arith.constant 0 : index
    %35 = vector.load %arg16[%c11, %c0_40] : memref<25x668xf32, #tpu.memory_space<vmem>>, vector<1x668xf32>
    tpu.vector_store %arg16[%c11, %c0_40], %34 {strides = array<i32>} : memref<25x668xf32, #tpu.memory_space<vmem>>, vector<1x668xf32>,
    %c0_41 = arith.constant 0 : index
    %c0_42 = arith.constant 0 : index
    %c58 = arith.constant 58 : index
    %36 = vector.load %arg1[%c0_41, %c0_42, %c58] : memref<1x1x784xf32, #tpu.memory_space<vmem>>, vector<1x1x668xf32>
    %37 = vector.shape_cast %36 : vector<1x1x668xf32> to vector<1x668xf32>
    %c12 = arith.constant 12 : index
    %c0_43 = arith.constant 0 : index
    %38 = vector.load %arg16[%c12, %c0_43] : memref<25x668xf32, #tpu.memory_space<vmem>>, vector<1x668xf32>
    tpu.vector_store %arg16[%c12, %c0_43], %37 {strides = array<i32>} : memref<25x668xf32, #tpu.memory_space<vmem>>, vector<1x668xf32>,
    %c0_44 = arith.constant 0 : index
    %c0_45 = arith.constant 0 : index
    %c59 = arith.constant 59 : index
    %39 = vector.load %arg1[%c0_44, %c0_45, %c59] : memref<1x1x784xf32, #tpu.memory_space<vmem>>, vector<1x1x668xf32>
    %40 = vector.shape_cast %39 : vector<1x1x668xf32> to vector<1x668xf32>
    %c13 = arith.constant 13 : index
    %c0_46 = arith.constant 0 : index
    %41 = vector.load %arg16[%c13, %c0_46] : memref<25x668xf32, #tpu.memory_space<vmem>>, vector<1x668xf32>
    tpu.vector_store %arg16[%c13, %c0_46], %40 {strides = array<i32>} : memref<25x668xf32, #tpu.memory_space<vmem>>, vector<1x668xf32>,
    %c0_47 = arith.constant 0 : index
    %c0_48 = arith.constant 0 : index
    %c60 = arith.constant 60 : index
    %42 = vector.load %arg1[%c0_47, %c0_48, %c60] : memref<1x1x784xf32, #tpu.memory_space<vmem>>, vector<1x1x668xf32>
    %43 = vector.shape_cast %42 : vector<1x1x668xf32> to vector<1x668xf32>
    %c14 = arith.constant 14 : index
    %c0_49 = arith.constant 0 : index
    %44 = vector.load %arg16[%c14, %c0_49] : memref<25x668xf32, #tpu.memory_space<vmem>>, vector<1x668xf32>
    tpu.vector_store %arg16[%c14, %c0_49], %43 {strides = array<i32>} : memref<25x668xf32, #tpu.memory_space<vmem>>, vector<1x668xf32>,
    %c0_50 = arith.constant 0 : index
    %c0_51 = arith.constant 0 : index
    %c84 = arith.constant 84 : index
    %45 = vector.load %arg1[%c0_50, %c0_51, %c84] : memref<1x1x784xf32, #tpu.memory_space<vmem>>, vector<1x1x668xf32>
    %46 = vector.shape_cast %45 : vector<1x1x668xf32> to vector<1x668xf32>
    %c15 = arith.constant 15 : index
    %c0_52 = arith.constant 0 : index
    %47 = vector.load %arg16[%c15, %c0_52] : memref<25x668xf32, #tpu.memory_space<vmem>>, vector<1x668xf32>
    tpu.vector_store %arg16[%c15, %c0_52], %46 {strides = array<i32>} : memref<25x668xf32, #tpu.memory_space<vmem>>, vector<1x668xf32>,
    %c0_53 = arith.constant 0 : index
    %c0_54 = arith.constant 0 : index
    %c85 = arith.constant 85 : index
    %48 = vector.load %arg1[%c0_53, %c0_54, %c85] : memref<1x1x784xf32, #tpu.memory_space<vmem>>, vector<1x1x668xf32>
    %49 = vector.shape_cast %48 : vector<1x1x668xf32> to vector<1x668xf32>
    %c16 = arith.constant 16 : index
    %c0_55 = arith.constant 0 : index
    %50 = vector.load %arg16[%c16, %c0_55] : memref<25x668xf32, #tpu.memory_space<vmem>>, vector<1x668xf32>
    tpu.vector_store %arg16[%c16, %c0_55], %49 {strides = array<i32>} : memref<25x668xf32, #tpu.memory_space<vmem>>, vector<1x668xf32>,
    %c0_56 = arith.constant 0 : index
    %c0_57 = arith.constant 0 : index
    %c86 = arith.constant 86 : index
    %51 = vector.load %arg1[%c0_56, %c0_57, %c86] : memref<1x1x784xf32, #tpu.memory_space<vmem>>, vector<1x1x668xf32>
    %52 = vector.shape_cast %51 : vector<1x1x668xf32> to vector<1x668xf32>
    %c17 = arith.constant 17 : index
    %c0_58 = arith.constant 0 : index
    %53 = vector.load %arg16[%c17, %c0_58] : memref<25x668xf32, #tpu.memory_space<vmem>>, vector<1x668xf32>
    tpu.vector_store %arg16[%c17, %c0_58], %52 {strides = array<i32>} : memref<25x668xf32, #tpu.memory_space<vmem>>, vector<1x668xf32>,
    %c0_59 = arith.constant 0 : index
    %c0_60 = arith.constant 0 : index
    %c87 = arith.constant 87 : index
    %54 = vector.load %arg1[%c0_59, %c0_60, %c87] : memref<1x1x784xf32, #tpu.memory_space<vmem>>, vector<1x1x668xf32>
    %55 = vector.shape_cast %54 : vector<1x1x668xf32> to vector<1x668xf32>
    %c18 = arith.constant 18 : index
    %c0_61 = arith.constant 0 : index
    %56 = vector.load %arg16[%c18, %c0_61] : memref<25x668xf32, #tpu.memory_space<vmem>>, vector<1x668xf32>
    tpu.vector_store %arg16[%c18, %c0_61], %55 {strides = array<i32>} : memref<25x668xf32, #tpu.memory_space<vmem>>, vector<1x668xf32>,
    %c0_62 = arith.constant 0 : index
    %c0_63 = arith.constant 0 : index
    %c88 = arith.constant 88 : index
    %57 = vector.load %arg1[%c0_62, %c0_63, %c88] : memref<1x1x784xf32, #tpu.memory_space<vmem>>, vector<1x1x668xf32>
    %58 = vector.shape_cast %57 : vector<1x1x668xf32> to vector<1x668xf32>
    %c19 = arith.constant 19 : index
    %c0_64 = arith.constant 0 : index
    %59 = vector.load %arg16[%c19, %c0_64] : memref<25x668xf32, #tpu.memory_space<vmem>>, vector<1x668xf32>
    tpu.vector_store %arg16[%c19, %c0_64], %58 {strides = array<i32>} : memref<25x668xf32, #tpu.memory_space<vmem>>, vector<1x668xf32>,
    %c0_65 = arith.constant 0 : index
    %c0_66 = arith.constant 0 : index
    %c112 = arith.constant 112 : index
    %60 = vector.load %arg1[%c0_65, %c0_66, %c112] : memref<1x1x784xf32, #tpu.memory_space<vmem>>, vector<1x1x668xf32>
    %61 = vector.shape_cast %60 : vector<1x1x668xf32> to vector<1x668xf32>
    %c20 = arith.constant 20 : index
    %c0_67 = arith.constant 0 : index
    %62 = vector.load %arg16[%c20, %c0_67] : memref<25x668xf32, #tpu.memory_space<vmem>>, vector<1x668xf32>
    tpu.vector_store %arg16[%c20, %c0_67], %61 {strides = array<i32>} : memref<25x668xf32, #tpu.memory_space<vmem>>, vector<1x668xf32>,
    %c0_68 = arith.constant 0 : index
    %c0_69 = arith.constant 0 : index
    %c113 = arith.constant 113 : index
    %63 = vector.load %arg1[%c0_68, %c0_69, %c113] : memref<1x1x784xf32, #tpu.memory_space<vmem>>, vector<1x1x668xf32>
    %64 = vector.shape_cast %63 : vector<1x1x668xf32> to vector<1x668xf32>
    %c21 = arith.constant 21 : index
    %c0_70 = arith.constant 0 : index
    %65 = vector.load %arg16[%c21, %c0_70] : memref<25x668xf32, #tpu.memory_space<vmem>>, vector<1x668xf32>
    tpu.vector_store %arg16[%c21, %c0_70], %64 {strides = array<i32>} : memref<25x668xf32, #tpu.memory_space<vmem>>, vector<1x668xf32>,
    %c0_71 = arith.constant 0 : index
    %c0_72 = arith.constant 0 : index
    %c114 = arith.constant 114 : index
    %66 = vector.load %arg1[%c0_71, %c0_72, %c114] : memref<1x1x784xf32, #tpu.memory_space<vmem>>, vector<1x1x668xf32>
    %67 = vector.shape_cast %66 : vector<1x1x668xf32> to vector<1x668xf32>
    %c22 = arith.constant 22 : index
    %c0_73 = arith.constant 0 : index
    %68 = vector.load %arg16[%c22, %c0_73] : memref<25x668xf32, #tpu.memory_space<vmem>>, vector<1x668xf32>
    tpu.vector_store %arg16[%c22, %c0_73], %67 {strides = array<i32>} : memref<25x668xf32, #tpu.memory_space<vmem>>, vector<1x668xf32>,
    %c0_74 = arith.constant 0 : index
    %c0_75 = arith.constant 0 : index
    %c115 = arith.constant 115 : index
    %69 = vector.load %arg1[%c0_74, %c0_75, %c115] : memref<1x1x784xf32, #tpu.memory_space<vmem>>, vector<1x1x668xf32>
    %70 = vector.shape_cast %69 : vector<1x1x668xf32> to vector<1x668xf32>
    %c23 = arith.constant 23 : index
    %c0_76 = arith.constant 0 : index
    %71 = vector.load %arg16[%c23, %c0_76] : memref<25x668xf32, #tpu.memory_space<vmem>>, vector<1x668xf32>
    tpu.vector_store %arg16[%c23, %c0_76], %70 {strides = array<i32>} : memref<25x668xf32, #tpu.memory_space<vmem>>, vector<1x668xf32>,
    %c0_77 = arith.constant 0 : index
    %c0_78 = arith.constant 0 : index
    %c116 = arith.constant 116 : index
    %72 = vector.load %arg1[%c0_77, %c0_78, %c116] : memref<1x1x784xf32, #tpu.memory_space<vmem>>, vector<1x1x668xf32>
    %73 = vector.shape_cast %72 : vector<1x1x668xf32> to vector<1x668xf32>
    %c24 = arith.constant 24 : index
    %c0_79 = arith.constant 0 : index
    %74 = vector.load %arg16[%c24, %c0_79] : memref<25x668xf32, #tpu.memory_space<vmem>>, vector<1x668xf32>
    tpu.vector_store %arg16[%c24, %c0_79], %73 {strides = array<i32>} : memref<25x668xf32, #tpu.memory_space<vmem>>, vector<1x668xf32>,
    %c0_80 = arith.constant 0 : index
    %c0_81 = arith.constant 0 : index
    %75 = vector.load %arg2[%c0_80, %c0_81] : memref<6x25xf32, #tpu.memory_space<vmem>>, vector<6x25xf32>
    %c0_82 = arith.constant 0 : index
    %c0_83 = arith.constant 0 : index
    %76 = vector.load %arg16[%c0_82, %c0_83] : memref<25x668xf32, #tpu.memory_space<vmem>>, vector<25x668xf32>
    %cst = arith.constant dense<0.000000e+00> : vector<6x668xf32>
    %77 = tpu.matmul %75, %76, %cst {dimension_numbers = #tpu.dot_dimension_numbers<[1], [0], [0], [1], [0, 0, 1, 1], [], []>} : vector<6x25xf32>, vector<25x668xf32>, vector<6x668xf32> -> vector<6x668xf32>
    %c0_84 = arith.constant 0 : index
    %c0_85 = arith.constant 0 : index
    %78 = vector.load %arg3[%c0_84, %c0_85] : memref<6x1xf32, #tpu.memory_space<vmem>>, vector<6x1xf32>
    %79 = vector.broadcast %78 : vector<6x1xf32> to vector<6x668xf32>
    %80 = arith.addf %77, %79 : vector<6x668xf32>
    %cst_86 = arith.constant 0.000000e+00 : f32
    %81 = vector.broadcast %cst_86 : f32 to vector<6x668xf32>
    %82 = arith.maximumf %80, %81 : vector<6x668xf32>
    %83 = vector.extract_strided_slice %82 {offsets = [0, 0], sizes = [6, 639], strides = [1, 1]} : vector<6x668xf32> to vector<6x639xf32>
    %84 = vector.extract_strided_slice %82 {offsets = [0, 1], sizes = [6, 639], strides = [1, 1]} : vector<6x668xf32> to vector<6x639xf32>
    %85 = arith.maximumf %83, %84 : vector<6x639xf32>
    %86 = vector.extract_strided_slice %82 {offsets = [0, 28], sizes = [6, 639], strides = [1, 1]} : vector<6x668xf32> to vector<6x639xf32>
    %87 = vector.extract_strided_slice %82 {offsets = [0, 29], sizes = [6, 639], strides = [1, 1]} : vector<6x668xf32> to vector<6x639xf32>
    %88 = arith.maximumf %86, %87 : vector<6x639xf32>
    %89 = arith.maximumf %85, %88 : vector<6x639xf32>
    %c0_87 = arith.constant 0 : index
    %c0_88 = arith.constant 0 : index
    %90 = vector.load %arg4[%c0_87, %c0_88] : memref<639x144xf32, #tpu.memory_space<vmem>>, vector<639x144xf32>
    %cst_89 = arith.constant dense<0.000000e+00> : vector<6x144xf32>
    %91 = tpu.matmul %89, %90, %cst_89 {dimension_numbers = #tpu.dot_dimension_numbers<[1], [0], [0], [1], [0, 0, 1, 1], [], []>} : vector<6x639xf32>, vector<639x144xf32>, vector<6x144xf32> -> vector<6x144xf32>
    %92 = vector.extract_strided_slice %91 {offsets = [0, 0], sizes = [6, 92], strides = [1, 1]} : vector<6x144xf32> to vector<6x92xf32>
    %c0_90 = arith.constant 0 : index
    %c0_91 = arith.constant 0 : index
    %93 = vector.load %arg17[%c0_90, %c0_91] : memref<150x92xf32, #tpu.memory_space<vmem>>, vector<6x92xf32>
    tpu.vector_store %arg17[%c0_90, %c0_91], %92 {strides = array<i32>} : memref<150x92xf32, #tpu.memory_space<vmem>>, vector<6x92xf32>,
    %94 = vector.extract_strided_slice %91 {offsets = [0, 1], sizes = [6, 92], strides = [1, 1]} : vector<6x144xf32> to vector<6x92xf32>
    %c6_92 = arith.constant 6 : index
    %c0_93 = arith.constant 0 : index
    %95 = vector.load %arg17[%c6_92, %c0_93] : memref<150x92xf32, #tpu.memory_space<vmem>>, vector<6x92xf32>
    tpu.vector_store %arg17[%c6_92, %c0_93], %94 {strides = array<i32>} : memref<150x92xf32, #tpu.memory_space<vmem>>, vector<6x92xf32>,
    %96 = vector.extract_strided_slice %91 {offsets = [0, 2], sizes = [6, 92], strides = [1, 1]} : vector<6x144xf32> to vector<6x92xf32>
    %c12_94 = arith.constant 12 : index
    %c0_95 = arith.constant 0 : index
    %97 = vector.load %arg17[%c12_94, %c0_95] : memref<150x92xf32, #tpu.memory_space<vmem>>, vector<6x92xf32>
    tpu.vector_store %arg17[%c12_94, %c0_95], %96 {strides = array<i32>} : memref<150x92xf32, #tpu.memory_space<vmem>>, vector<6x92xf32>,
    %98 = vector.extract_strided_slice %91 {offsets = [0, 3], sizes = [6, 92], strides = [1, 1]} : vector<6x144xf32> to vector<6x92xf32>
    %c18_96 = arith.constant 18 : index
    %c0_97 = arith.constant 0 : index
    %99 = vector.load %arg17[%c18_96, %c0_97] : memref<150x92xf32, #tpu.memory_space<vmem>>, vector<6x92xf32>
    tpu.vector_store %arg17[%c18_96, %c0_97], %98 {strides = array<i32>} : memref<150x92xf32, #tpu.memory_space<vmem>>, vector<6x92xf32>,
    %100 = vector.extract_strided_slice %91 {offsets = [0, 4], sizes = [6, 92], strides = [1, 1]} : vector<6x144xf32> to vector<6x92xf32>
    %c24_98 = arith.constant 24 : index
    %c0_99 = arith.constant 0 : index
    %101 = vector.load %arg17[%c24_98, %c0_99] : memref<150x92xf32, #tpu.memory_space<vmem>>, vector<6x92xf32>
    tpu.vector_store %arg17[%c24_98, %c0_99], %100 {strides = array<i32>} : memref<150x92xf32, #tpu.memory_space<vmem>>, vector<6x92xf32>,
    %102 = vector.extract_strided_slice %91 {offsets = [0, 12], sizes = [6, 92], strides = [1, 1]} : vector<6x144xf32> to vector<6x92xf32>
    %c30_100 = arith.constant 30 : index
    %c0_101 = arith.constant 0 : index
    %103 = vector.load %arg17[%c30_100, %c0_101] : memref<150x92xf32, #tpu.memory_space<vmem>>, vector<6x92xf32>
    tpu.vector_store %arg17[%c30_100, %c0_101], %102 {strides = array<i32>} : memref<150x92xf32, #tpu.memory_space<vmem>>, vector<6x92xf32>,
    %104 = vector.extract_strided_slice %91 {offsets = [0, 13], sizes = [6, 92], strides = [1, 1]} : vector<6x144xf32> to vector<6x92xf32>
    %c36 = arith.constant 36 : index
    %c0_102 = arith.constant 0 : index
    %105 = vector.load %arg17[%c36, %c0_102] : memref<150x92xf32, #tpu.memory_space<vmem>>, vector<6x92xf32>
    tpu.vector_store %arg17[%c36, %c0_102], %104 {strides = array<i32>} : memref<150x92xf32, #tpu.memory_space<vmem>>, vector<6x92xf32>,
    %106 = vector.extract_strided_slice %91 {offsets = [0, 14], sizes = [6, 92], strides = [1, 1]} : vector<6x144xf32> to vector<6x92xf32>
    %c42 = arith.constant 42 : index
    %c0_103 = arith.constant 0 : index
    %107 = vector.load %arg17[%c42, %c0_103] : memref<150x92xf32, #tpu.memory_space<vmem>>, vector<6x92xf32>
    tpu.vector_store %arg17[%c42, %c0_103], %106 {strides = array<i32>} : memref<150x92xf32, #tpu.memory_space<vmem>>, vector<6x92xf32>,
    %108 = vector.extract_strided_slice %91 {offsets = [0, 15], sizes = [6, 92], strides = [1, 1]} : vector<6x144xf32> to vector<6x92xf32>
    %c48 = arith.constant 48 : index
    %c0_104 = arith.constant 0 : index
    %109 = vector.load %arg17[%c48, %c0_104] : memref<150x92xf32, #tpu.memory_space<vmem>>, vector<6x92xf32>
    tpu.vector_store %arg17[%c48, %c0_104], %108 {strides = array<i32>} : memref<150x92xf32, #tpu.memory_space<vmem>>, vector<6x92xf32>,
    %110 = vector.extract_strided_slice %91 {offsets = [0, 16], sizes = [6, 92], strides = [1, 1]} : vector<6x144xf32> to vector<6x92xf32>
    %c54 = arith.constant 54 : index
    %c0_105 = arith.constant 0 : index
    %111 = vector.load %arg17[%c54, %c0_105] : memref<150x92xf32, #tpu.memory_space<vmem>>, vector<6x92xf32>
    tpu.vector_store %arg17[%c54, %c0_105], %110 {strides = array<i32>} : memref<150x92xf32, #tpu.memory_space<vmem>>, vector<6x92xf32>,
    %112 = vector.extract_strided_slice %91 {offsets = [0, 24], sizes = [6, 92], strides = [1, 1]} : vector<6x144xf32> to vector<6x92xf32>
    %c60_106 = arith.constant 60 : index
    %c0_107 = arith.constant 0 : index
    %113 = vector.load %arg17[%c60_106, %c0_107] : memref<150x92xf32, #tpu.memory_space<vmem>>, vector<6x92xf32>
    tpu.vector_store %arg17[%c60_106, %c0_107], %112 {strides = array<i32>} : memref<150x92xf32, #tpu.memory_space<vmem>>, vector<6x92xf32>,
    %114 = vector.extract_strided_slice %91 {offsets = [0, 25], sizes = [6, 92], strides = [1, 1]} : vector<6x144xf32> to vector<6x92xf32>
    %c66 = arith.constant 66 : index
    %c0_108 = arith.constant 0 : index
    %115 = vector.load %arg17[%c66, %c0_108] : memref<150x92xf32, #tpu.memory_space<vmem>>, vector<6x92xf32>
    tpu.vector_store %arg17[%c66, %c0_108], %114 {strides = array<i32>} : memref<150x92xf32, #tpu.memory_space<vmem>>, vector<6x92xf32>,
    %116 = vector.extract_strided_slice %91 {offsets = [0, 26], sizes = [6, 92], strides = [1, 1]} : vector<6x144xf32> to vector<6x92xf32>
    %c72 = arith.constant 72 : index
    %c0_109 = arith.constant 0 : index
    %117 = vector.load %arg17[%c72, %c0_109] : memref<150x92xf32, #tpu.memory_space<vmem>>, vector<6x92xf32>
    tpu.vector_store %arg17[%c72, %c0_109], %116 {strides = array<i32>} : memref<150x92xf32, #tpu.memory_space<vmem>>, vector<6x92xf32>,
    %118 = vector.extract_strided_slice %91 {offsets = [0, 27], sizes = [6, 92], strides = [1, 1]} : vector<6x144xf32> to vector<6x92xf32>
    %c78 = arith.constant 78 : index
    %c0_110 = arith.constant 0 : index
    %119 = vector.load %arg17[%c78, %c0_110] : memref<150x92xf32, #tpu.memory_space<vmem>>, vector<6x92xf32>
    tpu.vector_store %arg17[%c78, %c0_110], %118 {strides = array<i32>} : memref<150x92xf32, #tpu.memory_space<vmem>>, vector<6x92xf32>,
    %120 = vector.extract_strided_slice %91 {offsets = [0, 28], sizes = [6, 92], strides = [1, 1]} : vector<6x144xf32> to vector<6x92xf32>
    %c84_111 = arith.constant 84 : index
    %c0_112 = arith.constant 0 : index
    %121 = vector.load %arg17[%c84_111, %c0_112] : memref<150x92xf32, #tpu.memory_space<vmem>>, vector<6x92xf32>
    tpu.vector_store %arg17[%c84_111, %c0_112], %120 {strides = array<i32>} : memref<150x92xf32, #tpu.memory_space<vmem>>, vector<6x92xf32>,
    %122 = vector.extract_strided_slice %91 {offsets = [0, 36], sizes = [6, 92], strides = [1, 1]} : vector<6x144xf32> to vector<6x92xf32>
    %c90 = arith.constant 90 : index
    %c0_113 = arith.constant 0 : index
    %123 = vector.load %arg17[%c90, %c0_113] : memref<150x92xf32, #tpu.memory_space<vmem>>, vector<6x92xf32>
    tpu.vector_store %arg17[%c90, %c0_113], %122 {strides = array<i32>} : memref<150x92xf32, #tpu.memory_space<vmem>>, vector<6x92xf32>,
    %124 = vector.extract_strided_slice %91 {offsets = [0, 37], sizes = [6, 92], strides = [1, 1]} : vector<6x144xf32> to vector<6x92xf32>
    %c96 = arith.constant 96 : index
    %c0_114 = arith.constant 0 : index
    %125 = vector.load %arg17[%c96, %c0_114] : memref<150x92xf32, #tpu.memory_space<vmem>>, vector<6x92xf32>
    tpu.vector_store %arg17[%c96, %c0_114], %124 {strides = array<i32>} : memref<150x92xf32, #tpu.memory_space<vmem>>, vector<6x92xf32>,
    %126 = vector.extract_strided_slice %91 {offsets = [0, 38], sizes = [6, 92], strides = [1, 1]} : vector<6x144xf32> to vector<6x92xf32>
    %c102 = arith.constant 102 : index
    %c0_115 = arith.constant 0 : index
    %127 = vector.load %arg17[%c102, %c0_115] : memref<150x92xf32, #tpu.memory_space<vmem>>, vector<6x92xf32>
    tpu.vector_store %arg17[%c102, %c0_115], %126 {strides = array<i32>} : memref<150x92xf32, #tpu.memory_space<vmem>>, vector<6x92xf32>,
    %128 = vector.extract_strided_slice %91 {offsets = [0, 39], sizes = [6, 92], strides = [1, 1]} : vector<6x144xf32> to vector<6x92xf32>
    %c108 = arith.constant 108 : index
    %c0_116 = arith.constant 0 : index
    %129 = vector.load %arg17[%c108, %c0_116] : memref<150x92xf32, #tpu.memory_space<vmem>>, vector<6x92xf32>
    tpu.vector_store %arg17[%c108, %c0_116], %128 {strides = array<i32>} : memref<150x92xf32, #tpu.memory_space<vmem>>, vector<6x92xf32>,
    %130 = vector.extract_strided_slice %91 {offsets = [0, 40], sizes = [6, 92], strides = [1, 1]} : vector<6x144xf32> to vector<6x92xf32>
    %c114_117 = arith.constant 114 : index
    %c0_118 = arith.constant 0 : index
    %131 = vector.load %arg17[%c114_117, %c0_118] : memref<150x92xf32, #tpu.memory_space<vmem>>, vector<6x92xf32>
    tpu.vector_store %arg17[%c114_117, %c0_118], %130 {strides = array<i32>} : memref<150x92xf32, #tpu.memory_space<vmem>>, vector<6x92xf32>,
    %132 = vector.extract_strided_slice %91 {offsets = [0, 48], sizes = [6, 92], strides = [1, 1]} : vector<6x144xf32> to vector<6x92xf32>
    %c120 = arith.constant 120 : index
    %c0_119 = arith.constant 0 : index
    %133 = vector.load %arg17[%c120, %c0_119] : memref<150x92xf32, #tpu.memory_space<vmem>>, vector<6x92xf32>
    tpu.vector_store %arg17[%c120, %c0_119], %132 {strides = array<i32>} : memref<150x92xf32, #tpu.memory_space<vmem>>, vector<6x92xf32>,
    %134 = vector.extract_strided_slice %91 {offsets = [0, 49], sizes = [6, 92], strides = [1, 1]} : vector<6x144xf32> to vector<6x92xf32>
    %c126 = arith.constant 126 : index
    %c0_120 = arith.constant 0 : index
    %135 = vector.load %arg17[%c126, %c0_120] : memref<150x92xf32, #tpu.memory_space<vmem>>, vector<6x92xf32>
    tpu.vector_store %arg17[%c126, %c0_120], %134 {strides = array<i32>} : memref<150x92xf32, #tpu.memory_space<vmem>>, vector<6x92xf32>,
    %136 = vector.extract_strided_slice %91 {offsets = [0, 50], sizes = [6, 92], strides = [1, 1]} : vector<6x144xf32> to vector<6x92xf32>
    %c132 = arith.constant 132 : index
    %c0_121 = arith.constant 0 : index
    %137 = vector.load %arg17[%c132, %c0_121] : memref<150x92xf32, #tpu.memory_space<vmem>>, vector<6x92xf32>
    tpu.vector_store %arg17[%c132, %c0_121], %136 {strides = array<i32>} : memref<150x92xf32, #tpu.memory_space<vmem>>, vector<6x92xf32>,
    %138 = vector.extract_strided_slice %91 {offsets = [0, 51], sizes = [6, 92], strides = [1, 1]} : vector<6x144xf32> to vector<6x92xf32>
    %c138 = arith.constant 138 : index
    %c0_122 = arith.constant 0 : index
    %139 = vector.load %arg17[%c138, %c0_122] : memref<150x92xf32, #tpu.memory_space<vmem>>, vector<6x92xf32>
    tpu.vector_store %arg17[%c138, %c0_122], %138 {strides = array<i32>} : memref<150x92xf32, #tpu.memory_space<vmem>>, vector<6x92xf32>,
    %140 = vector.extract_strided_slice %91 {offsets = [0, 52], sizes = [6, 92], strides = [1, 1]} : vector<6x144xf32> to vector<6x92xf32>
    %c144 = arith.constant 144 : index
    %c0_123 = arith.constant 0 : index
    %141 = vector.load %arg17[%c144, %c0_123] : memref<150x92xf32, #tpu.memory_space<vmem>>, vector<6x92xf32>
    tpu.vector_store %arg17[%c144, %c0_123], %140 {strides = array<i32>} : memref<150x92xf32, #tpu.memory_space<vmem>>, vector<6x92xf32>,
    %c0_124 = arith.constant 0 : index
    %c0_125 = arith.constant 0 : index
    %142 = vector.load %arg5[%c0_124, %c0_125] : memref<16x150xf32, #tpu.memory_space<vmem>>, vector<16x150xf32>
    %c0_126 = arith.constant 0 : index
    %c0_127 = arith.constant 0 : index
    %143 = vector.load %arg17[%c0_126, %c0_127] : memref<150x92xf32, #tpu.memory_space<vmem>>, vector<150x92xf32>
    %cst_128 = arith.constant dense<0.000000e+00> : vector<16x92xf32>
    %144 = tpu.matmul %142, %143, %cst_128 {dimension_numbers = #tpu.dot_dimension_numbers<[1], [0], [0], [1], [0, 0, 1, 1], [], []>} : vector<16x150xf32>, vector<150x92xf32>, vector<16x92xf32> -> vector<16x92xf32>
    %c0_129 = arith.constant 0 : index
    %c0_130 = arith.constant 0 : index
    %145 = vector.load %arg6[%c0_129, %c0_130] : memref<16x1xf32, #tpu.memory_space<vmem>>, vector<16x1xf32>
    %146 = vector.broadcast %145 : vector<16x1xf32> to vector<16x92xf32>
    %147 = arith.addf %144, %146 : vector<16x92xf32>
    %cst_131 = arith.constant 0.000000e+00 : f32
    %148 = vector.broadcast %cst_131 : f32 to vector<16x92xf32>
    %149 = arith.maximumf %147, %148 : vector<16x92xf32>
    %150 = vector.extract_strided_slice %149 {offsets = [0, 0], sizes = [16, 79], strides = [1, 1]} : vector<16x92xf32> to vector<16x79xf32>
    %151 = vector.extract_strided_slice %149 {offsets = [0, 1], sizes = [16, 79], strides = [1, 1]} : vector<16x92xf32> to vector<16x79xf32>
    %152 = arith.maximumf %150, %151 : vector<16x79xf32>
    %153 = vector.extract_strided_slice %149 {offsets = [0, 12], sizes = [16, 79], strides = [1, 1]} : vector<16x92xf32> to vector<16x79xf32>
    %154 = vector.extract_strided_slice %149 {offsets = [0, 13], sizes = [16, 79], strides = [1, 1]} : vector<16x92xf32> to vector<16x79xf32>
    %155 = arith.maximumf %153, %154 : vector<16x79xf32>
    %156 = arith.maximumf %152, %155 : vector<16x79xf32>
    %c0_132 = arith.constant 0 : index
    %c0_133 = arith.constant 0 : index
    %157 = vector.load %arg7[%c0_132, %c0_133] : memref<79x256xf32, #tpu.memory_space<vmem>>, vector<79x256xf32>
    %cst_134 = arith.constant dense<0.000000e+00> : vector<16x256xf32>
    %158 = tpu.matmul %156, %157, %cst_134 {dimension_numbers = #tpu.dot_dimension_numbers<[1], [0], [0], [1], [0, 0, 1, 1], [], []>} : vector<16x79xf32>, vector<79x256xf32>, vector<16x256xf32> -> vector<16x256xf32>
    %c0_135 = arith.constant 0 : index
    %c0_136 = arith.constant 0 : index
    %159 = vector.load %arg8[%c0_135, %c0_136] : memref<16x256xf32, #tpu.memory_space<vmem>>, vector<16x256xf32>
    %160 = arith.mulf %158, %159 : vector<16x256xf32>
    %cst_137 = arith.constant dense<0.000000e+00> : vector<256xf32>
    %161 = vector.multi_reduction <add>, %160, %cst_137 [0] : vector<16x256xf32> to vector<256xf32>
    %162 = vector.shape_cast %161 : vector<256xf32> to vector<1x256xf32>
    %c0_138 = arith.constant 0 : index
    %c0_139 = arith.constant 0 : index
    %163 = vector.load %arg9[%c0_138, %c0_139] : memref<256x120xf32, #tpu.memory_space<vmem>>, vector<256x120xf32>
    %cst_140 = arith.constant dense<0.000000e+00> : vector<1x120xf32>
    %164 = tpu.matmul %162, %163, %cst_140 {dimension_numbers = #tpu.dot_dimension_numbers<[1], [0], [0], [1], [0, 0, 1, 1], [], []>} : vector<1x256xf32>, vector<256x120xf32>, vector<1x120xf32> -> vector<1x120xf32>
    %c0_141 = arith.constant 0 : index
    %c0_142 = arith.constant 0 : index
    %165 = vector.load %arg10[%c0_141, %c0_142] : memref<1x120xf32, #tpu.memory_space<vmem>>, vector<1x120xf32>
    %166 = arith.addf %164, %165 : vector<1x120xf32>
    %cst_143 = arith.constant 0.000000e+00 : f32
    %167 = vector.broadcast %cst_143 : f32 to vector<1x120xf32>
    %168 = arith.maximumf %166, %167 : vector<1x120xf32>
    %c0_144 = arith.constant 0 : index
    %c0_145 = arith.constant 0 : index
    %169 = vector.load %arg11[%c0_144, %c0_145] : memref<120x84xf32, #tpu.memory_space<vmem>>, vector<120x84xf32>
    %cst_146 = arith.constant dense<0.000000e+00> : vector<1x84xf32>
    %170 = tpu.matmul %168, %169, %cst_146 {dimension_numbers = #tpu.dot_dimension_numbers<[1], [0], [0], [1], [0, 0, 1, 1], [], []>} : vector<1x120xf32>, vector<120x84xf32>, vector<1x84xf32> -> vector<1x84xf32>
    %c0_147 = arith.constant 0 : index
    %c0_148 = arith.constant 0 : index
    %171 = vector.load %arg12[%c0_147, %c0_148] : memref<1x84xf32, #tpu.memory_space<vmem>>, vector<1x84xf32>
    %172 = arith.addf %170, %171 : vector<1x84xf32>
    %cst_149 = arith.constant 0.000000e+00 : f32
    %173 = vector.broadcast %cst_149 : f32 to vector<1x84xf32>
    %174 = arith.maximumf %172, %173 : vector<1x84xf32>
    %c0_150 = arith.constant 0 : index
    %c0_151 = arith.constant 0 : index
    %175 = vector.load %arg13[%c0_150, %c0_151] : memref<84x10xf32, #tpu.memory_space<vmem>>, vector<84x10xf32>
    %cst_152 = arith.constant dense<0.000000e+00> : vector<1x10xf32>
    %176 = tpu.matmul %174, %175, %cst_152 {dimension_numbers = #tpu.dot_dimension_numbers<[1], [0], [0], [1], [0, 0, 1, 1], [], []>} : vector<1x84xf32>, vector<84x10xf32>, vector<1x10xf32> -> vector<1x10xf32>
    %c0_153 = arith.constant 0 : index
    %c0_154 = arith.constant 0 : index
    %177 = vector.load %arg14[%c0_153, %c0_154] : memref<1x10xf32, #tpu.memory_space<vmem>>, vector<1x10xf32>
    %178 = arith.addf %176, %177 : vector<1x10xf32>
    %c0_155 = arith.constant 0 : index
    %c0_156 = arith.constant 0 : index
    %c0_157 = arith.constant 0 : index
    %179 = vector.load %arg15[%c0_155, %c0_156, %c0_157] : memref<1x1x10xf32, #tpu.memory_space<vmem>>, vector<1x1x10xf32>
    %180 = vector.shape_cast %179 : vector<1x1x10xf32> to vector<1x10xf32>
    %181 = vector.shape_cast %178 : vector<1x10xf32> to vector<1x1x10xf32>
    tpu.vector_store %arg15[%c0_155, %c0_156, %c0_157], %181 {strides = array<i32>} : memref<1x1x10xf32, #tpu.memory_space<vmem>>, vector<1x1x10xf32>,
    return
  }
  func.func @transform_0(%arg0: i32) -> (i32, i32, i32) {
    %c0_i32 = arith.constant 0 : i32
    %c0_i32_0 = arith.constant 0 : i32
    %c0_i32_1 = arith.constant 0 : i32
    return %arg0, %c0_i32, %c0_i32_0 : i32, i32, i32
  }
  func.func @transform_1(%arg0: i32) -> (i32, i32) {
    %c0_i32 = arith.constant 0 : i32
    %c0_i32_0 = arith.constant 0 : i32
    %c0_i32_1 = arith.constant 0 : i32
    return %c0_i32, %c0_i32_0 : i32, i32
  }
  func.func @transform_2(%arg0: i32) -> (i32, i32) {
    %c0_i32 = arith.constant 0 : i32
    %c0_i32_0 = arith.constant 0 : i32
    %c0_i32_1 = arith.constant 0 : i32
    return %c0_i32, %c0_i32_0 : i32, i32
  }
  func.func @transform_3(%arg0: i32) -> (i32, i32) {
    %c0_i32 = arith.constant 0 : i32
    %c0_i32_0 = arith.constant 0 : i32
    %c0_i32_1 = arith.constant 0 : i32
    return %c0_i32, %c0_i32_0 : i32, i32
  }
  func.func @transform_4(%arg0: i32) -> (i32, i32) {
    %c0_i32 = arith.constant 0 : i32
    %c0_i32_0 = arith.constant 0 : i32
    %c0_i32_1 = arith.constant 0 : i32
    return %c0_i32, %c0_i32_0 : i32, i32
  }
  func.func @transform_5(%arg0: i32) -> (i32, i32) {
    %c0_i32 = arith.constant 0 : i32
    %c0_i32_0 = arith.constant 0 : i32
    %c0_i32_1 = arith.constant 0 : i32
    return %c0_i32, %c0_i32_0 : i32, i32
  }
  func.func @transform_6(%arg0: i32) -> (i32, i32) {
    %c0_i32 = arith.constant 0 : i32
    %c0_i32_0 = arith.constant 0 : i32
    %c0_i32_1 = arith.constant 0 : i32
    return %c0_i32, %c0_i32_0 : i32, i32
  }
  func.func @transform_7(%arg0: i32) -> (i32, i32) {
    %c0_i32 = arith.constant 0 : i32
    %c0_i32_0 = arith.constant 0 : i32
    %c0_i32_1 = arith.constant 0 : i32
    return %c0_i32, %c0_i32_0 : i32, i32
  }
  func.func @transform_8(%arg0: i32) -> (i32, i32) {
    %c0_i32 = arith.constant 0 : i32
    %c0_i32_0 = arith.constant 0 : i32
    %c0_i32_1 = arith.constant 0 : i32
    return %c0_i32, %c0_i32_0 : i32, i32
  }
  func.func @transform_9(%arg0: i32) -> (i32, i32) {
    %c0_i32 = arith.constant 0 : i32
    %c0_i32_0 = arith.constant 0 : i32
    %c0_i32_1 = arith.constant 0 : i32
    return %c0_i32, %c0_i32_0 : i32, i32
  }
  func.func @transform_10(%arg0: i32) -> (i32, i32) {
    %c0_i32 = arith.constant 0 : i32
    %c0_i32_0 = arith.constant 0 : i32
    %c0_i32_1 = arith.constant 0 : i32
    return %c0_i32, %c0_i32_0 : i32, i32
  }
  func.func @transform_11(%arg0: i32) -> (i32, i32) {
    %c0_i32 = arith.constant 0 : i32
    %c0_i32_0 = arith.constant 0 : i32
    %c0_i32_1 = arith.constant 0 : i32
    return %c0_i32, %c0_i32_0 : i32, i32
  }
  func.func @transform_12(%arg0: i32) -> (i32, i32) {
    %c0_i32 = arith.constant 0 : i32
    %c0_i32_0 = arith.constant 0 : i32
    %c0_i32_1 = arith.constant 0 : i32
    return %c0_i32, %c0_i32_0 : i32, i32
  }
  func.func @transform_13(%arg0: i32) -> (i32, i32) {
    %c0_i32 = arith.constant 0 : i32
    %c0_i32_0 = arith.constant 0 : i32
    %c0_i32_1 = arith.constant 0 : i32
    return %c0_i32, %c0_i32_0 : i32, i32
  }
  func.func @transform_14(%arg0: i32) -> (i32, i32, i32) {
    %c0_i32 = arith.constant 0 : i32
    %c0_i32_0 = arith.constant 0 : i32
    %c0_i32_1 = arith.constant 0 : i32
    return %arg0, %c0_i32, %c0_i32_0 : i32, i32, i32
  }
}

</mosaic_0001>

<llo_original>
// kernel: lenet_forward.1
$region0: #{lenet_forward.1}
  #allocation0 [shape = 'u32[]', space=smem, size = 0x4, offset = 0x4, fixed_abs, tag = 'smem constant byte address 0x4 - core index']
  #allocation1 [shape = 'u32[72,128]{1,0:T(1,128)}', space=vmem, size = 0x9000, scoped, tag = 'internal scratch']
  #allocation2 [shape = 'f32[25,668]{1,0:T(8,128)}', space=vmem, size = 0x18000, scoped, tag = 'scratch operand']
  #allocation3 [shape = 'f32[150,92]{1,0:T(8,128)}', space=vmem, size = 0x13000, scoped, tag = 'scratch operand']
  %s0 = inlined_call_operand.vmem [shape: f32[2,1,784], index: 0, kind: input, shape index: {}]
  %s1 = inlined_call_operand.vmem [shape: f32[6,25], index: 1, kind: input, shape index: {}]
  %s2 = inlined_call_operand.vmem [shape: f32[6,1], index: 2, kind: input, shape index: {}]
  %s3 = inlined_call_operand.vmem [shape: f32[639,144], index: 3, kind: input, shape index: {}]
  %s4 = inlined_call_operand.vmem [shape: f32[16,150], index: 4, kind: input, shape index: {}]
  %s5 = inlined_call_operand.vmem [shape: f32[16,1], index: 5, kind: input, shape index: {}]
  %s6 = inlined_call_operand.vmem [shape: f32[79,256], index: 6, kind: input, shape index: {}]
  %s7 = inlined_call_operand.vmem [shape: f32[16,256], index: 7, kind: input, shape index: {}]
  %s8 = inlined_call_operand.vmem [shape: f32[256,120], index: 8, kind: input, shape index: {}]
  %s9 = inlined_call_operand.vmem [shape: f32[1,120], index: 9, kind: input, shape index: {}]
  %s10 = inlined_call_operand.vmem [shape: f32[120,84], index: 10, kind: input, shape index: {}]
  %s11 = inlined_call_operand.vmem [shape: f32[1,84], index: 11, kind: input, shape index: {}]
  %s12 = inlined_call_operand.vmem [shape: f32[84,10], index: 12, kind: input, shape index: {}]
  %s13 = inlined_call_operand.vmem [shape: f32[1,10], index: 13, kind: input, shape index: {}]
  %s14 = inlined_call_operand.hbm [shape: f32[2,1,10], index: 14, kind: output, shape index: {}]
  %s15 = sld [smem:[#allocation0]]
  $region89: #{lenet_forward.1} parent=0
    _
  %s17 = ssub.s32 1, %s15
  %s18 = scalar_select 0, %s17, %s15
  $region1: #{lenet_forward.1} parent=0
    #allocation4 [shape = 'u8[1024]{0}', space=vmem, size = 0x400, scoped, tag = 'output window, operand 0']
    #allocation5 [shape = 's32[2]{0}', space=sflag, size = 0x8, scoped, tag = 'scoped memory for lenet_forward.1']
    %19 = vsyncpa [#allocation5], 0
    %s20 = scalar_lea.sflag [#allocation5], 1
    %21 = vsyncpa %s20, 0
    loop: start=0, step=1, limit=4
    $region2: #{lenet_forward.1} parent=1 // loop_pre_header
      _
    $region3: #{lenet_forward.1} parent=1 // loop_header
      %s23 = sphi 0, %s27
      %p24 = scmp.ge.s32.totalorder %s23, 4
      %s33 = sphi 0, %s35
      %s36 = sphi 0, %s33
      %s37 = sphi 0, %s36
      %s53 = sphi 0, %s37
      %s57 = sphi 0, %s57
      %s59 = sphi 0, %s57
      %s60 = sphi 0, %s59
      %s74 = sphi 0, %s60
      %s78 = sphi 0, %s78
      %s80 = sphi 0, %s78
      %s81 = sphi 0, %s80
      %s95 = sphi 0, %s81
      %s99 = sphi 0, %s99
      %s101 = sphi 0, %s99
      %s102 = sphi 0, %s101
      %s116 = sphi 0, %s102
      %s120 = sphi 0, %s120
      %s122 = sphi 0, %s120
      %s123 = sphi 0, %s122
      %s137 = sphi 0, %s123
      %s141 = sphi 0, %s141
      %s143 = sphi 0, %s141
      %s144 = sphi 0, %s143
      %s158 = sphi 0, %s144
      %s162 = sphi 0, %s162
      %s164 = sphi 0, %s162
      %s165 = sphi 0, %s164
      %s179 = sphi 0, %s165
      %s183 = sphi 0, %s183
      %s185 = sphi 0, %s183
      %s186 = sphi 0, %s185
      %s200 = sphi 0, %s186
      %s204 = sphi 0, %s204
      %s206 = sphi 0, %s204
      %s207 = sphi 0, %s206
      %s221 = sphi 0, %s207
      %s225 = sphi 0, %s225
      %s227 = sphi 0, %s225
      %s228 = sphi 0, %s227
      %s242 = sphi 0, %s228
      %s246 = sphi 0, %s246
      %s248 = sphi 0, %s246
      %s249 = sphi 0, %s248
      %s263 = sphi 0, %s249
      %s267 = sphi 0, %s267
      %s269 = sphi 0, %s267
      %s270 = sphi 0, %s269
      %s284 = sphi 0, %s270
      %s288 = sphi 0, %s288
      %s290 = sphi 0, %s288
      %s291 = sphi 0, %s290
      %s305 = sphi 0, %s291
      %s309 = sphi 0, %s309
      %s311 = sphi 0, %s309
      %s312 = sphi 0, %s311
      %s326 = sphi 0, %s312
      %s332 = sphi 0, %s334
      %s335 = sphi 0, %s332
      %s336 = sphi 0, %s335
      %s352 = sphi 0, %s336
    $region4: #{lenet_forward.1} parent=1 // loop_header_branch
      %26 = sbr.rel (%p24) target = $region8
    $region5: #{lenet_forward.1} parent=1 // loop_body
      %s28 = ssub.s32 %s23, 1
      %s29 = ssub.s32 %s23, 2
      %s30 = sadd.s32 %s23, 1
      %s31 = ssub.s32 %s23, %s30
      %p32 = scmp.eq.s32.totalorder %s31, 0
      %s34 = sadd.s32 %s33, 1
      %s35 = scalar_select %p32, %s33, %s34
      %p38 = pneg %p32
      %p39 = scmp.eq.s32.totalorder %s23, 1
      %p40 = por %p38, %p39
      %p41 = scmp.ne.s32.totalorder %s33, %s36
      %p42 = scmp.eq.s32.totalorder %s23, 0
      %p43 = por %p41, %p42
      %p44 = scmp.ne.s32.totalorder %s33, %s36
      %p45 = scmp.eq.s32.totalorder %s28, 1
      %p46 = por %p44, %p45
      %p47 = scmp.ne.s32.totalorder %s36, %s37
      %p48 = scmp.eq.s32.totalorder %s28, 0
      %p49 = por %p47, %p48
      %p50 = scmp.ne.s32.totalorder %s36, %s37
      %p51 = scmp.eq.s32.totalorder %s29, 1
      %p52 = por %p50, %p51
      %p54 = scmp.ne.s32.totalorder %s37, %s53
      %p55 = scmp.eq.s32.totalorder %s29, 0
      %p56 = por %p54, %p55
      %s58 = sadd.s32 %s57, 1
      %p61 = scmp.eq.s32.totalorder %s23, 1
      %p62 = scmp.ne.s32.totalorder %s57, %s59
      %p63 = scmp.eq.s32.totalorder %s23, 0
      %p64 = por %p62, %p63
      %p65 = scmp.ne.s32.totalorder %s57, %s59
      %p66 = scmp.eq.s32.totalorder %s28, 1
      %p67 = por %p65, %p66
      %p68 = scmp.ne.s32.totalorder %s59, %s60
      %p69 = scmp.eq.s32.totalorder %s28, 0
      %p70 = por %p68, %p69
      %p71 = scmp.ne.s32.totalorder %s59, %s60
      %p72 = scmp.eq.s32.totalorder %s29, 1
      %p73 = por %p71, %p72
      %p75 = scmp.ne.s32.totalorder %s60, %s74
      %p76 = scmp.eq.s32.totalorder %s29, 0
      %p77 = por %p75, %p76
      %s79 = sadd.s32 %s78, 1
      %p82 = scmp.eq.s32.totalorder %s23, 1
      %p83 = scmp.ne.s32.totalorder %s78, %s80
      %p84 = scmp.eq.s32.totalorder %s23, 0
      %p85 = por %p83, %p84
      %p86 = scmp.ne.s32.totalorder %s78, %s80
      %p87 = scmp.eq.s32.totalorder %s28, 1
      %p88 = por %p86, %p87
      %p89 = scmp.ne.s32.totalorder %s80, %s81
      %p90 = scmp.eq.s32.totalorder %s28, 0
      %p91 = por %p89, %p90
      %p92 = scmp.ne.s32.totalorder %s80, %s81
      %p93 = scmp.eq.s32.totalorder %s29, 1
      %p94 = por %p92, %p93
      %p96 = scmp.ne.s32.totalorder %s81, %s95
      %p97 = scmp.eq.s32.totalorder %s29, 0
      %p98 = por %p96, %p97
      %s100 = sadd.s32 %s99, 1
      %p103 = scmp.eq.s32.totalorder %s23, 1
      %p104 = scmp.ne.s32.totalorder %s99, %s101
      %p105 = scmp.eq.s32.totalorder %s23, 0
      %p106 = por %p104, %p105
      %p107 = scmp.ne.s32.totalorder %s99, %s101
      %p108 = scmp.eq.s32.totalorder %s28, 1
      %p109 = por %p107, %p108
      %p110 = scmp.ne.s32.totalorder %s101, %s102
      %p111 = scmp.eq.s32.totalorder %s28, 0
      %p112 = por %p110, %p111
      %p113 = scmp.ne.s32.totalorder %s101, %s102
      %p114 = scmp.eq.s32.totalorder %s29, 1
      %p115 = por %p113, %p114
      %p117 = scmp.ne.s32.totalorder %s102, %s116
      %p118 = scmp.eq.s32.totalorder %s29, 0
      %p119 = por %p117, %p118
      %s121 = sadd.s32 %s120, 1
      %p124 = scmp.eq.s32.totalorder %s23, 1
      %p125 = scmp.ne.s32.totalorder %s120, %s122
      %p126 = scmp.eq.s32.totalorder %s23, 0
      %p127 = por %p125, %p126
      %p128 = scmp.ne.s32.totalorder %s120, %s122
      %p129 = scmp.eq.s32.totalorder %s28, 1
      %p130 = por %p128, %p129
      %p131 = scmp.ne.s32.totalorder %s122, %s123
      %p132 = scmp.eq.s32.totalorder %s28, 0
      %p133 = por %p131, %p132
      %p134 = scmp.ne.s32.totalorder %s122, %s123
      %p135 = scmp.eq.s32.totalorder %s29, 1
      %p136 = por %p134, %p135
      %p138 = scmp.ne.s32.totalorder %s123, %s137
      %p139 = scmp.eq.s32.totalorder %s29, 0
      %p140 = por %p138, %p139
      %s142 = sadd.s32 %s141, 1
      %p145 = scmp.eq.s32.totalorder %s23, 1
      %p146 = scmp.ne.s32.totalorder %s141, %s143
      %p147 = scmp.eq.s32.totalorder %s23, 0
      %p148 = por %p146, %p147
      %p149 = scmp.ne.s32.totalorder %s141, %s143
      %p150 = scmp.eq.s32.totalorder %s28, 1
      %p151 = por %p149, %p150
      %p152 = scmp.ne.s32.totalorder %s143, %s144
      %p153 = scmp.eq.s32.totalorder %s28, 0
      %p154 = por %p152, %p153
      %p155 = scmp.ne.s32.totalorder %s143, %s144
      %p156 = scmp.eq.s32.totalorder %s29, 1
      %p157 = por %p155, %p156
      %p159 = scmp.ne.s32.totalorder %s144, %s158
      %p160 = scmp.eq.s32.totalorder %s29, 0
      %p161 = por %p159, %p160
      %s163 = sadd.s32 %s162, 1
      %p166 = scmp.eq.s32.totalorder %s23, 1
      %p167 = scmp.ne.s32.totalorder %s162, %s164
      %p168 = scmp.eq.s32.totalorder %s23, 0
      %p169 = por %p167, %p168
      %p170 = scmp.ne.s32.totalorder %s162, %s164
      %p171 = scmp.eq.s32.totalorder %s28, 1
      %p172 = por %p170, %p171
      %p173 = scmp.ne.s32.totalorder %s164, %s165
      %p174 = scmp.eq.s32.totalorder %s28, 0
      %p175 = por %p173, %p174
      %p176 = scmp.ne.s32.totalorder %s164, %s165
      %p177 = scmp.eq.s32.totalorder %s29, 1
      %p178 = por %p176, %p177
      %p180 = scmp.ne.s32.totalorder %s165, %s179
      %p181 = scmp.eq.s32.totalorder %s29, 0
      %p182 = por %p180, %p181
      %s184 = sadd.s32 %s183, 1
      %p187 = scmp.eq.s32.totalorder %s23, 1
      %p188 = scmp.ne.s32.totalorder %s183, %s185
      %p189 = scmp.eq.s32.totalorder %s23, 0
      %p190 = por %p188, %p189
      %p191 = scmp.ne.s32.totalorder %s183, %s185
      %p192 = scmp.eq.s32.totalorder %s28, 1
      %p193 = por %p191, %p192
      %p194 = scmp.ne.s32.totalorder %s185, %s186
      %p195 = scmp.eq.s32.totalorder %s28, 0
      %p196 = por %p194, %p195
      %p197 = scmp.ne.s32.totalorder %s185, %s186
      %p198 = scmp.eq.s32.totalorder %s29, 1
      %p199 = por %p197, %p198
      %p201 = scmp.ne.s32.totalorder %s186, %s200
      %p202 = scmp.eq.s32.totalorder %s29, 0
      %p203 = por %p201, %p202
      %s205 = sadd.s32 %s204, 1
      %p208 = scmp.eq.s32.totalorder %s23, 1
      %p209 = scmp.ne.s32.totalorder %s204, %s206
      %p210 = scmp.eq.s32.totalorder %s23, 0
      %p211 = por %p209, %p210
      %p212 = scmp.ne.s32.totalorder %s204, %s206
      %p213 = scmp.eq.s32.totalorder %s28, 1
      %p214 = por %p212, %p213
      %p215 = scmp.ne.s32.totalorder %s206, %s207
      %p216 = scmp.eq.s32.totalorder %s28, 0
      %p217 = por %p215, %p216
      %p218 = scmp.ne.s32.totalorder %s206, %s207
      %p219 = scmp.eq.s32.totalorder %s29, 1
      %p220 = por %p218, %p219
      %p222 = scmp.ne.s32.totalorder %s207, %s221
      %p223 = scmp.eq.s32.totalorder %s29, 0
      %p224 = por %p222, %p223
      %s226 = sadd.s32 %s225, 1
      %p229 = scmp.eq.s32.totalorder %s23, 1
      %p230 = scmp.ne.s32.totalorder %s225, %s227
      %p231 = scmp.eq.s32.totalorder %s23, 0
      %p232 = por %p230, %p231
      %p233 = scmp.ne.s32.totalorder %s225, %s227
      %p234 = scmp.eq.s32.totalorder %s28, 1
      %p235 = por %p233, %p234
      %p236 = scmp.ne.s32.totalorder %s227, %s228
      %p237 = scmp.eq.s32.totalorder %s28, 0
      %p238 = por %p236, %p237
      %p239 = scmp.ne.s32.totalorder %s227, %s228
      %p240 = scmp.eq.s32.totalorder %s29, 1
      %p241 = por %p239, %p240
      %p243 = scmp.ne.s32.totalorder %s228, %s242
      %p244 = scmp.eq.s32.totalorder %s29, 0
      %p245 = por %p243, %p244
      %s247 = sadd.s32 %s246, 1
      %p250 = scmp.eq.s32.totalorder %s23, 1
      %p251 = scmp.ne.s32.totalorder %s246, %s248
      %p252 = scmp.eq.s32.totalorder %s23, 0
      %p253 = por %p251, %p252
      %p254 = scmp.ne.s32.totalorder %s246, %s248
      %p255 = scmp.eq.s32.totalorder %s28, 1
      %p256 = por %p254, %p255
      %p257 = scmp.ne.s32.totalorder %s248, %s249
      %p258 = scmp.eq.s32.totalorder %s28, 0
      %p259 = por %p257, %p258
      %p260 = scmp.ne.s32.totalorder %s248, %s249
      %p261 = scmp.eq.s32.totalorder %s29, 1
      %p262 = por %p260, %p261
      %p264 = scmp.ne.s32.totalorder %s249, %s263
      %p265 = scmp.eq.s32.totalorder %s29, 0
      %p266 = por %p264, %p265
      %s268 = sadd.s32 %s267, 1
      %p271 = scmp.eq.s32.totalorder %s23, 1
      %p272 = scmp.ne.s32.totalorder %s267, %s269
      %p273 = scmp.eq.s32.totalorder %s23, 0
      %p274 = por %p272, %p273
      %p275 = scmp.ne.s32.totalorder %s267, %s269
      %p276 = scmp.eq.s32.totalorder %s28, 1
      %p277 = por %p275, %p276
      %p278 = scmp.ne.s32.totalorder %s269, %s270
      %p279 = scmp.eq.s32.totalorder %s28, 0
      %p280 = por %p278, %p279
      %p281 = scmp.ne.s32.totalorder %s269, %s270
      %p282 = scmp.eq.s32.totalorder %s29, 1
      %p283 = por %p281, %p282
      %p285 = scmp.ne.s32.totalorder %s270, %s284
      %p286 = scmp.eq.s32.totalorder %s29, 0
      %p287 = por %p285, %p286
      %s289 = sadd.s32 %s288, 1
      %p292 = scmp.eq.s32.totalorder %s23, 1
      %p293 = scmp.ne.s32.totalorder %s288, %s290
      %p294 = scmp.eq.s32.totalorder %s23, 0
      %p295 = por %p293, %p294
      %p296 = scmp.ne.s32.totalorder %s288, %s290
      %p297 = scmp.eq.s32.totalorder %s28, 1
      %p298 = por %p296, %p297
      %p299 = scmp.ne.s32.totalorder %s290, %s291
      %p300 = scmp.eq.s32.totalorder %s28, 0
      %p301 = por %p299, %p300
      %p302 = scmp.ne.s32.totalorder %s290, %s291
      %p303 = scmp.eq.s32.totalorder %s29, 1
      %p304 = por %p302, %p303
      %p306 = scmp.ne.s32.totalorder %s291, %s305
      %p307 = scmp.eq.s32.totalorder %s29, 0
      %p308 = por %p306, %p307
      %s310 = sadd.s32 %s309, 1
      %p313 = scmp.eq.s32.totalorder %s23, 1
      %p314 = scmp.ne.s32.totalorder %s309, %s311
      %p315 = scmp.eq.s32.totalorder %s23, 0
      %p316 = por %p314, %p315
      %p317 = scmp.ne.s32.totalorder %s309, %s311
      %p318 = scmp.eq.s32.totalorder %s28, 1
      %p319 = por %p317, %p318
      %p320 = scmp.ne.s32.totalorder %s311, %s312
      %p321 = scmp.eq.s32.totalorder %s28, 0
      %p322 = por %p320, %p321
      %p323 = scmp.ne.s32.totalorder %s311, %s312
      %p324 = scmp.eq.s32.totalorder %s29, 1
      %p325 = por %p323, %p324
      %p327 = scmp.ne.s32.totalorder %s312, %s326
      %p328 = scmp.eq.s32.totalorder %s29, 0
      %p329 = por %p327, %p328
      %s330 = ssub.s32 %s23, %s30
      %p331 = scmp.eq.s32.totalorder %s330, 0
      %s333 = sadd.s32 %s332, 1
      %s334 = scalar_select %p331, %s332, %s333
      %p337 = pneg %p331
      %p338 = scmp.eq.s32.totalorder %s23, 1
      %p339 = por %p337, %p338
      %p340 = scmp.ne.s32.totalorder %s332, %s335
      %p341 = scmp.eq.s32.totalorder %s23, 0
      %p342 = por %p340, %p341
      %p343 = scmp.ne.s32.totalorder %s332, %s335
      %p344 = scmp.eq.s32.totalorder %s28, 1
      %p345 = por %p343, %p344
      %p346 = scmp.ne.s32.totalorder %s335, %s336
      %p347 = scmp.eq.s32.totalorder %s28, 0
      %p348 = por %p346, %p347
      %p349 = scmp.ne.s32.totalorder %s335, %s336
      %p350 = scmp.eq.s32.totalorder %s29, 1
      %p351 = por %p349, %p350
      %p353 = scmp.ne.s32.totalorder %s336, %s352
      %p354 = scmp.eq.s32.totalorder %s29, 0
      %p355 = por %p353, %p354
      %p356 = scmp.le.s32.totalorder 1, %s23
      %p357 = scmp.lt.s32.totalorder %s23, 3
      %p358 = pnand %p356, %p357
      %p359 = pneg %p358
      // Predicated region
      $region9: #{lenet_forward.1} parent=5 // pred_check
        _
      $region10: #{lenet_forward.1} parent=5 // pred_check_branch
        %361 = sbr.rel (%p358) target = $region12
      $region11: #{lenet_forward.1} parent=5 // pred_region
        %s362 = ssub.s32 %s23, 1
        // Predicated region
        $region13: #{lenet_forward.1} parent=11 // pred_check
          %p363 = pneg %p70
        $region14: #{lenet_forward.1} parent=11 // pred_check_branch
          %365 = sbr.rel (%p363) target = $region16
        $region15: #{lenet_forward.1} parent=11 // pred_region
          _
        $region16: #{lenet_forward.1} parent=11 // pred_fallthru
          _
        // Predicated region
        $region17: #{lenet_forward.1} parent=11 // pred_check
          %p366 = pneg %p91
        $region18: #{lenet_forward.1} parent=11 // pred_check_branch
          %368 = sbr.rel (%p366) target = $region20
        $region19: #{lenet_forward.1} parent=11 // pred_region
          _
        $region20: #{lenet_forward.1} parent=11 // pred_fallthru
          _
        // Predicated region
        $region21: #{lenet_forward.1} parent=11 // pred_check
          %p369 = pneg %p112
        $region22: #{lenet_forward.1} parent=11 // pred_check_branch
          %371 = sbr.rel (%p369) target = $region24
        $region23: #{lenet_forward.1} parent=11 // pred_region
          _
        $region24: #{lenet_forward.1} parent=11 // pred_fallthru
          _
        // Predicated region
        $region25: #{lenet_forward.1} parent=11 // pred_check
          %p372 = pneg %p133
        $region26: #{lenet_forward.1} parent=11 // pred_check_branch
          %374 = sbr.rel (%p372) target = $region28
        $region27: #{lenet_forward.1} parent=11 // pred_region
          _
        $region28: #{lenet_forward.1} parent=11 // pred_fallthru
          _
        // Predicated region
        $region29: #{lenet_forward.1} parent=11 // pred_check
          %p375 = pneg %p154
        $region30: #{lenet_forward.1} parent=11 // pred_check_branch
          %377 = sbr.rel (%p375) target = $region32
        $region31: #{lenet_forward.1} parent=11 // pred_region
          _
        $region32: #{lenet_forward.1} parent=11 // pred_fallthru
          _
        // Predicated region
        $region33: #{lenet_forward.1} parent=11 // pred_check
          %p378 = pneg %p175
        $region34: #{lenet_forward.1} parent=11 // pred_check_branch
          %380 = sbr.rel (%p378) target = $region36
        $region35: #{lenet_forward.1} parent=11 // pred_region
          _
        $region36: #{lenet_forward.1} parent=11 // pred_fallthru
          _
        // Predicated region
        $region37: #{lenet_forward.1} parent=11 // pred_check
          %p381 = pneg %p196
        $region38: #{lenet_forward.1} parent=11 // pred_check_branch
          %383 = sbr.rel (%p381) target = $region40
        $region39: #{lenet_forward.1} parent=11 // pred_region
          _
        $region40: #{lenet_forward.1} parent=11 // pred_fallthru
          _
        // Predicated region
        $region41: #{lenet_forward.1} parent=11 // pred_check
          %p384 = pneg %p217
        $region42: #{lenet_forward.1} parent=11 // pred_check_branch
          %386 = sbr.rel (%p384) target = $region44
        $region43: #{lenet_forward.1} parent=11 // pred_region
          _
        $region44: #{lenet_forward.1} parent=11 // pred_fallthru
          _
        // Predicated region
        $region45: #{lenet_forward.1} parent=11 // pred_check
          %p387 = pneg %p238
        $region46: #{lenet_forward.1} parent=11 // pred_check_branch
          %389 = sbr.rel (%p387) target = $region48
        $region47: #{lenet_forward.1} parent=11 // pred_region
          _
        $region48: #{lenet_forward.1} parent=11 // pred_fallthru
          _
        // Predicated region
        $region49: #{lenet_forward.1} parent=11 // pred_check
          %p390 = pneg %p259
        $region50: #{lenet_forward.1} parent=11 // pred_check_branch
          %392 = sbr.rel (%p390) target = $region52
        $region51: #{lenet_forward.1} parent=11 // pred_region
          _
        $region52: #{lenet_forward.1} parent=11 // pred_fallthru
          _
        // Predicated region
        $region53: #{lenet_forward.1} parent=11 // pred_check
          %p393 = pneg %p280
        $region54: #{lenet_forward.1} parent=11 // pred_check_branch
          %395 = sbr.rel (%p393) target = $region56
        $region55: #{lenet_forward.1} parent=11 // pred_region
          _
        $region56: #{lenet_forward.1} parent=11 // pred_fallthru
          _
        // Predicated region
        $region57: #{lenet_forward.1} parent=11 // pred_check
          %p396 = pneg %p301
        $region58: #{lenet_forward.1} parent=11 // pred_check_branch
          %398 = sbr.rel (%p396) target = $region60
        $region59: #{lenet_forward.1} parent=11 // pred_region
          _
        $region60: #{lenet_forward.1} parent=11 // pred_fallthru
          _
        // Predicated region
        $region61: #{lenet_forward.1} parent=11 // pred_check
          %p399 = pneg %p322
        $region62: #{lenet_forward.1} parent=11 // pred_check_branch
          %401 = sbr.rel (%p399) target = $region64
        $region63: #{lenet_forward.1} parent=11 // pred_region
          _
        $region64: #{lenet_forward.1} parent=11 // pred_fallthru
          _
      $region12: #{lenet_forward.1} parent=5 // pred_fallthru
        _
      %p402 = scmp.lt.s32.totalorder %s23, 2
      // Predicated region
      $region65: #{lenet_forward.1} parent=5 // pred_check
        %p403 = pneg %p402
      $region66: #{lenet_forward.1} parent=5 // pred_check_branch
        %405 = sbr.rel (%p403) target = $region68
      $region67: #{lenet_forward.1} parent=5 // pred_region
        // Predicated region
        $region69: #{lenet_forward.1} parent=67 // pred_check
          %p406 = pneg %p43
        $region70: #{lenet_forward.1} parent=67 // pred_check_branch
          %408 = sbr.rel (%p406) target = $region72
        $region71: #{lenet_forward.1} parent=67 // pred_region
          %p409 = scmp.lt.s32.totalorder %s23, 1
          %s410 = scalar_select %p409, %s23, 1
          %s411 = smul.addr %s410, 7
          %s412 = scalar_lea.vmem %s0, %s411
        $region72: #{lenet_forward.1} parent=67 // pred_fallthru
          _
      $region68: #{lenet_forward.1} parent=5 // pred_fallthru
        _
      %p413 = scmp.le.s32.totalorder 1, %s23
      %p414 = scmp.lt.s32.totalorder %s23, 3
      %p415 = pnand %p413, %p414
      %p416 = pneg %p415
      // Predicated region
      $region73: #{lenet_forward.1} parent=5 // pred_check
        _
      $region74: #{lenet_forward.1} parent=5 // pred_check_branch
        %418 = sbr.rel (%p415) target = $region76
      $region75: #{lenet_forward.1} parent=5 // pred_region
        %s419 = ssub.s32 %s23, 1
        %p420 = scmp.lt.s32.totalorder %s28, 1
        %s421 = scalar_select %p420, %s28, 1
        %s422 = smul.addr %s421, 7
        %s423 = scalar_lea.vmem %s0, %s422
        %p424 = pneg %p49
        %p425 = pneg %p46
        %p426 = pneg %p70
        %p427 = pneg %p67
        %p428 = pneg %p91
        %p429 = pneg %p88
        %p430 = pneg %p112
        %p431 = pneg %p109
        %p432 = pneg %p133
        %p433 = pneg %p130
        %p434 = pneg %p154
        %p435 = pneg %p151
        %p436 = pneg %p175
        %p437 = pneg %p172
        %p438 = pneg %p196
        %p439 = pneg %p193
        %p440 = pneg %p217
        %p441 = pneg %p214
        %p442 = pneg %p238
        %p443 = pneg %p235
        %p444 = pneg %p259
        %p445 = pneg %p256
        %p446 = pneg %p280
        %p447 = pneg %p277
        %p448 = pneg %p301
        %p449 = pneg %p298
        %p450 = pneg %p322
        %p451 = pneg %p319
        %p452 = pneg %p348
        %p453 = pneg %p345
        %s454 = sand.u32 %s335, 1
        %s455 = scalar_lea.sflag [#allocation5], %s454
        %s456 = sand.u32 %s335, 1
        %s457 = scalar_lea.vmem [#allocation4], %s456
        %p458 = scmp.lt.s32.totalorder %s28, 1
        %s459 = scalar_select %p458, %s28, 1
        %s460 = smul.addr %s459, 7
        %s461 = scalar_lea.vmem %s0, %s460
        %v462 = vld [vmem:[%s461] sm:$0x3f]
        %v463 = vlaneseq
        %vm464 = vcmp.ge.s32.totalorder %v463, 0
        %vm465 = vcmp.lt.s32.totalorder %v463, 668
        %vm466 = vmand %vm464, %vm465
        %467 = vst.msk [vmem:[#allocation2] ss:$8 sm:$0xf] %vm466, %v462
        %468 = vst.msk [vmem:[#allocation2] ss:$8 sm:$0x30] %vm466, %v462
        %v469 = vld [vmem:[%s461] sm:$0x3f]
        %471 = vrot.lane.b32.xlu0 %v469, 127
        %v472 = vpop.permute.xlu0 %471
        %v473 = vrot.slane %v472, 1
        %vm474 = vcmask 1039360
        %v475 = vsel %vm474, %v472, %v473
        %s477 = scalar_lea.vmem [#allocation2], 1
        %478 = vst.msk [vmem:[%s477] ss:$8 sm:$0xf] %vm466, %v475
        %479 = vst.msk [vmem:[%s477] ss:$8 sm:$0x30] %vm466, %v475
        %v480 = vld [vmem:[%s461] sm:$0x3f]
        %482 = vrot.lane.b32.xlu0 %v480, 126
        %v483 = vpop.permute.xlu0 %482
        %v484 = vrot.slane %v483, 1
        %vm485 = vcmask 1031168
        %v486 = vsel %vm485, %v483, %v484
        %s488 = scalar_lea.vmem [#allocation2], 2
        %489 = vst.msk [vmem:[%s488] ss:$8 sm:$0xf] %vm466, %v486
        %490 = vst.msk [vmem:[%s488] ss:$8 sm:$0x30] %vm466, %v486
        %v491 = vld [vmem:[%s461] sm:$0x3f]
        %493 = vrot.lane.b32.xlu0 %v491, 125
        %v494 = vpop.permute.xlu0 %493
        %v495 = vrot.slane %v494, 1
        %vm496 = vcmask 1022976
        %v497 = vsel %vm496, %v494, %v495
        %s499 = scalar_lea.vmem [#allocation2], 3
        %500 = vst.msk [vmem:[%s499] ss:$8 sm:$0xf] %vm466, %v497
        %501 = vst.msk [vmem:[%s499] ss:$8 sm:$0x30] %vm466, %v497
        %v502 = vld [vmem:[%s461] sm:$0x3f]
        %504 = vrot.lane.b32.xlu0 %v502, 124
        %v505 = vpop.permute.xlu0 %504
        %v506 = vrot.slane %v505, 1
        %vm507 = vcmask 1014784
        %v508 = vsel %vm507, %v505, %v506
        %s510 = scalar_lea.vmem [#allocation2], 4
        %511 = vst.msk [vmem:[%s510] ss:$8 sm:$0xf] %vm466, %v508
        %512 = vst.msk [vmem:[%s510] ss:$8 sm:$0x30] %vm466, %v508
        %v513 = vld [vmem:[%s461] sm:$0x3f]
        %515 = vrot.lane.b32.xlu0 %v513, 100
        %v516 = vpop.permute.xlu0 %515
        %v517 = vrot.slane %v516, 1
        %vm518 = vcmask 818176
        %v519 = vsel %vm518, %v516, %v517
        %s521 = scalar_lea.vmem [#allocation2], 5
        %522 = vst.msk [vmem:[%s521] ss:$8 sm:$0xf] %vm466, %v519
        %523 = vst.msk [vmem:[%s521] ss:$8 sm:$0x30] %vm466, %v519
        %v524 = vld [vmem:[%s461] sm:$0x3f]
        %526 = vrot.lane.b32.xlu0 %v524, 99
        %v527 = vpop.permute.xlu0 %526
        %v528 = vrot.slane %v527, 1
        %vm529 = vcmask 809984
        %v530 = vsel %vm529, %v527, %v528
        %s532 = scalar_lea.vmem [#allocation2], 6
        %533 = vst.msk [vmem:[%s532] ss:$8 sm:$0xf] %vm466, %v530
        %534 = vst.msk [vmem:[%s532] ss:$8 sm:$0x30] %vm466, %v530
        %v535 = vld [vmem:[%s461] sm:$0x3f]
        %537 = vrot.lane.b32.xlu0 %v535, 98
        %v538 = vpop.permute.xlu0 %537
        %v539 = vrot.slane %v538, 1
        %vm540 = vcmask 801792
        %v541 = vsel %vm540, %v538, %v539
        %s543 = scalar_lea.vmem [#allocation2], 7
        %544 = vst.msk [vmem:[%s543] ss:$8 sm:$0xf] %vm466, %v541
        %545 = vst.msk [vmem:[%s543] ss:$8 sm:$0x30] %vm466, %v541
        %v546 = vld [vmem:[%s461] sm:$0x3f]
        %548 = vrot.lane.b32.xlu0 %v546, 97
        %v549 = vpop.permute.xlu0 %548
        %v550 = vrot.slane %v549, 1
        %vm551 = vcmask 793600
        %v552 = vsel %vm551, %v549, %v550
        %s554 = scalar_lea.vmem [#allocation2], 48
        %555 = vst.msk [vmem:[%s554] ss:$8 sm:$0xf] %vm466, %v552
        %556 = vst.msk [vmem:[%s554] ss:$8 sm:$0x30] %vm466, %v552
        %v557 = vld [vmem:[%s461] sm:$0x3f]
        %559 = vrot.lane.b32.xlu0 %v557, 96
        %v560 = vpop.permute.xlu0 %559
        %v561 = vrot.slane %v560, 1
        %vm562 = vcmask 785408
        %v563 = vsel %vm562, %v560, %v561
        %s565 = scalar_lea.vmem [#allocation2], 49
        %566 = vst.msk [vmem:[%s565] ss:$8 sm:$0xf] %vm466, %v563
        %567 = vst.msk [vmem:[%s565] ss:$8 sm:$0x30] %vm466, %v563
        %v568 = vld [vmem:[%s461] sm:$0x3f]
        %570 = vrot.lane.b32.xlu0 %v568, 72
        %v571 = vpop.permute.xlu0 %570
        %v572 = vrot.slane %v571, 1
        %vm573 = vcmask 588800
        %v574 = vsel %vm573, %v571, %v572
        %s576 = scalar_lea.vmem [#allocation2], 50
        %577 = vst.msk [vmem:[%s576] ss:$8 sm:$0xf] %vm466, %v574
        %578 = vst.msk [vmem:[%s576] ss:$8 sm:$0x30] %vm466, %v574
        %v579 = vld [vmem:[%s461] sm:$0x3f]
        %581 = vrot.lane.b32.xlu0 %v579, 71
        %v582 = vpop.permute.xlu0 %581
        %v583 = vrot.slane %v582, 1
        %vm584 = vcmask 580608
        %v585 = vsel %vm584, %v582, %v583
        %s587 = scalar_lea.vmem [#allocation2], 51
        %588 = vst.msk [vmem:[%s587] ss:$8 sm:$0xf] %vm466, %v585
        %589 = vst.msk [vmem:[%s587] ss:$8 sm:$0x30] %vm466, %v585
        %v590 = vld [vmem:[%s461] sm:$0x3f]
        %592 = vrot.lane.b32.xlu0 %v590, 70
        %v593 = vpop.permute.xlu0 %592
        %v594 = vrot.slane %v593, 1
        %vm595 = vcmask 572416
        %v596 = vsel %vm595, %v593, %v594
        %s598 = scalar_lea.vmem [#allocation2], 52
        %599 = vst.msk [vmem:[%s598] ss:$8 sm:$0xf] %vm466, %v596
        %600 = vst.msk [vmem:[%s598] ss:$8 sm:$0x30] %vm466, %v596
        %v601 = vld [vmem:[%s461] sm:$0x3f]
        %603 = vrot.lane.b32.xlu0 %v601, 69
        %v604 = vpop.permute.xlu0 %603
        %v605 = vrot.slane %v604, 1
        %vm606 = vcmask 564224
        %v607 = vsel %vm606, %v604, %v605
        %s609 = scalar_lea.vmem [#allocation2], 53
        %610 = vst.msk [vmem:[%s609] ss:$8 sm:$0xf] %vm466, %v607
        %611 = vst.msk [vmem:[%s609] ss:$8 sm:$0x30] %vm466, %v607
        %v612 = vld [vmem:[%s461] sm:$0x3f]
        %614 = vrot.lane.b32.xlu0 %v612, 68
        %v615 = vpop.permute.xlu0 %614
        %v616 = vrot.slane %v615, 1
        %vm617 = vcmask 556032
        %v618 = vsel %vm617, %v615, %v616
        %s620 = scalar_lea.vmem [#allocation2], 54
        %621 = vst.msk [vmem:[%s620] ss:$8 sm:$0xf] %vm466, %v618
        %622 = vst.msk [vmem:[%s620] ss:$8 sm:$0x30] %vm466, %v618
        %v623 = vld [vmem:[%s461] sm:$0x3f]
        %625 = vrot.lane.b32.xlu0 %v623, 44
        %v626 = vpop.permute.xlu0 %625
        %v627 = vrot.slane %v626, 1
        %vm628 = vcmask 359424
        %v629 = vsel %vm628, %v626, %v627
        %s631 = scalar_lea.vmem [#allocation2], 55
        %632 = vst.msk [vmem:[%s631] ss:$8 sm:$0xf] %vm466, %v629
        %633 = vst.msk [vmem:[%s631] ss:$8 sm:$0x30] %vm466, %v629
        %v634 = vld [vmem:[%s461] sm:$0x3f]
        %636 = vrot.lane.b32.xlu0 %v634, 43
        %v637 = vpop.permute.xlu0 %636
        %v638 = vrot.slane %v637, 1
        %vm639 = vcmask 351232
        %v640 = vsel %vm639, %v637, %v638
        %s642 = scalar_lea.vmem [#allocation2], 96
        %643 = vst.msk [vmem:[%s642] ss:$8 sm:$0xf] %vm466, %v640
        %644 = vst.msk [vmem:[%s642] ss:$8 sm:$0x30] %vm466, %v640
        %v645 = vld [vmem:[%s461] sm:$0x3f]
        %647 = vrot.lane.b32.xlu0 %v645, 42
        %v648 = vpop.permute.xlu0 %647
        %v649 = vrot.slane %v648, 1
        %vm650 = vcmask 343040
        %v651 = vsel %vm650, %v648, %v649
        %s653 = scalar_lea.vmem [#allocation2], 97
        %654 = vst.msk [vmem:[%s653] ss:$8 sm:$0xf] %vm466, %v651
        %655 = vst.msk [vmem:[%s653] ss:$8 sm:$0x30] %vm466, %v651
        %v656 = vld [vmem:[%s461] sm:$0x3f]
        %658 = vrot.lane.b32.xlu0 %v656, 41
        %v659 = vpop.permute.xlu0 %658
        %v660 = vrot.slane %v659, 1
        %vm661 = vcmask 334848
        %v662 = vsel %vm661, %v659, %v660
        %s664 = scalar_lea.vmem [#allocation2], 98
        %665 = vst.msk [vmem:[%s664] ss:$8 sm:$0xf] %vm466, %v662
        %666 = vst.msk [vmem:[%s664] ss:$8 sm:$0x30] %vm466, %v662
        %v667 = vld [vmem:[%s461] sm:$0x3f]
        %669 = vrot.lane.b32.xlu0 %v667, 40
        %v670 = vpop.permute.xlu0 %669
        %v671 = vrot.slane %v670, 1
        %vm672 = vcmask 326656
        %v673 = vsel %vm672, %v670, %v671
        %s675 = scalar_lea.vmem [#allocation2], 99
        %676 = vst.msk [vmem:[%s675] ss:$8 sm:$0xf] %vm466, %v673
        %677 = vst.msk [vmem:[%s675] ss:$8 sm:$0x30] %vm466, %v673
        %v678 = vld [vmem:[%s461] sm:$0x7f]
        %680 = vrot.lane.b32.xlu0 %v678, 16
        %v681 = vpop.permute.xlu0 %680
        %v682 = vrot.slane %v681, 1
        %vm683 = vcmask 130048
        %v684 = vsel %vm683, %v681, %v682
        %s686 = scalar_lea.vmem [#allocation2], 100
        %687 = vst.msk [vmem:[%s686] ss:$8 sm:$0xf] %vm466, %v684
        %688 = vst.msk [vmem:[%s686] ss:$8 sm:$0x30] %vm466, %v684
        %v689 = vld [vmem:[%s461] sm:$0x7f]
        %691 = vrot.lane.b32.xlu0 %v689, 15
        %v692 = vpop.permute.xlu0 %691
        %v693 = vrot.slane %v692, 1
        %vm694 = vcmask 121856
        %v695 = vsel %vm694, %v692, %v693
        %s697 = scalar_lea.vmem [#allocation2], 101
        %698 = vst.msk [vmem:[%s697] ss:$8 sm:$0xf] %vm466, %v695
        %699 = vst.msk [vmem:[%s697] ss:$8 sm:$0x30] %vm466, %v695
        %v700 = vld [vmem:[%s461] sm:$0x7f]
        %702 = vrot.lane.b32.xlu0 %v700, 14
        %v703 = vpop.permute.xlu0 %702
        %v704 = vrot.slane %v703, 1
        %vm705 = vcmask 113664
        %v706 = vsel %vm705, %v703, %v704
        %s708 = scalar_lea.vmem [#allocation2], 102
        %709 = vst.msk [vmem:[%s708] ss:$8 sm:$0xf] %vm466, %v706
        %710 = vst.msk [vmem:[%s708] ss:$8 sm:$0x30] %vm466, %v706
        %v711 = vld [vmem:[%s461] sm:$0x7f]
        %713 = vrot.lane.b32.xlu0 %v711, 13
        %v714 = vpop.permute.xlu0 %713
        %v715 = vrot.slane %v714, 1
        %vm716 = vcmask 105472
        %v717 = vsel %vm716, %v714, %v715
        %s719 = scalar_lea.vmem [#allocation2], 103
        %720 = vst.msk [vmem:[%s719] ss:$8 sm:$0xf] %vm466, %v717
        %721 = vst.msk [vmem:[%s719] ss:$8 sm:$0x30] %vm466, %v717
        %v722 = vld [vmem:[%s461] sm:$0x7f]
        %724 = vrot.lane.b32.xlu0 %v722, 12
        %v725 = vpop.permute.xlu0 %724
        %v726 = vrot.slane %v725, 1
        %vm727 = vcmask 97280
        %v728 = vsel %vm727, %v725, %v726
        %s730 = scalar_lea.vmem [#allocation2], 144
        %731 = vst.msk [vmem:[%s730] ss:$8 sm:$0xf] %vm466, %v728
        %732 = vst.msk [vmem:[%s730] ss:$8 sm:$0x30] %vm466, %v728
        %v733 = vld [vmem:[%s1] sm:$0x3f]
        %v734 = vld [vmem:[#allocation2] sm:$0xff]
        %v735 = vld [vmem:[#allocation2 + $0x8] sm:$0xff]
        %v736 = vld [vmem:[#allocation2 + $0x10] sm:$0xff]
        %v737 = vld [vmem:[#allocation2 + $0x18] sm:$0xff]
        %v738 = vld [vmem:[#allocation2 + $0x20] sm:$0xff]
        %v739 = vld [vmem:[#allocation2 + $0x28] sm:$0xff]
        %v740 = vld [vmem:[#allocation2 + $0x30] sm:$0xff]
        %v741 = vld [vmem:[#allocation2 + $0x38] sm:$0xff]
        %v742 = vld [vmem:[#allocation2 + $0x40] sm:$0xff]
        %v743 = vld [vmem:[#allocation2 + $0x48] sm:$0xff]
        %v744 = vld [vmem:[#allocation2 + $0x50] sm:$0xff]
        %v745 = vld [vmem:[#allocation2 + $0x58] sm:$0xff]
        %v746 = vld [vmem:[#allocation2 + $0x60] sm:$0xff]
        %v747 = vld [vmem:[#allocation2 + $0x68] sm:$0xff]
        %v748 = vld [vmem:[#allocation2 + $0x70] sm:$0xff]
        %v749 = vld [vmem:[#allocation2 + $0x78] sm:$0xff]
        %v750 = vld [vmem:[#allocation2 + $0x80] sm:$0xff]
        %v751 = vld [vmem:[#allocation2 + $0x88] sm:$0xff]
        %v752 = vld [vmem:[#allocation2 + $0x90] sm:$0x1]
        %v753 = vld [vmem:[#allocation2 + $0x98] sm:$0x1]
        %v754 = vld [vmem:[#allocation2 + $0xa0] sm:$0x1]
        %v755 = vld [vmem:[#allocation2 + $0xa8] sm:$0x1]
        %v756 = vld [vmem:[#allocation2 + $0xb0] sm:$0x1]
        %v757 = vld [vmem:[#allocation2 + $0xb8] sm:$0x1]
        %v758 = vld [vmem:[%s2] sm:$0x3f]
        %760 = vset.pattern.permute.xlu0 0
        %761 = vperm.xlu0 %760, %v758
        %v762 = vpop.permute.xlu0 %761
        %vm764 = vcmask 203776
        %v766 = vsel %vm764, %v733, 0
        %vm768 = vcmask 1040384
        %v770 = vsel %vm768, %v752, 0
        %v773 = vsel %vm768, %v753, 0
        %v776 = vsel %vm768, %v754, 0
        %v779 = vsel %vm768, %v755, 0
        %v782 = vsel %vm768, %v756, 0
        %v785 = vsel %vm768, %v757, 0
        %787 = vmatpush.msra.mxu0 0.0
        %788 = vmatpush.msra.mxu0 0.0
        %789 = vmatpush.msra.mxu0 0.0
        %790 = vmatpush.msra.mxu0 0.0
        %791 = vmatpush.msra.mxu0 0.0
        %792 = vmatpush.msra.mxu0 0.0
        %793 = vmatpush.msra.mxu0 0.0
        %794 = vmatpush.msra.mxu0 0.0
        %795 = vmatpush.msra.mxu0 0.0
        %796 = vmatpush.msra.mxu0 0.0
        %797 = vmatpush.msra.mxu0 0.0
        %798 = vmatpush.msra.mxu0 0.0
        %799 = vmatpush.msra.mxu0 %v770
        %800 = vmatpush.msra.mxu0 %v746
        %801 = vmatpush.msra.mxu0 %v740
        %802 = vmatpush.msra.mxu0 %v734
        %803 = vmatmul.f32.gmra.mxu0 %v766
        %v804 = vpop.f32.mrf.mxu0
        %v805 = vadd.f32 %v762, %v804
        %806 = vdwg.mxu0
        %807 = vmatpush.msra.mxu0 0.0
        %808 = vmatpush.msra.mxu0 0.0
        %809 = vmatpush.msra.mxu0 0.0
        %810 = vmatpush.msra.mxu0 0.0
        %811 = vmatpush.msra.mxu0 0.0
        %812 = vmatpush.msra.mxu0 0.0
        %813 = vmatpush.msra.mxu0 0.0
        %814 = vmatpush.msra.mxu0 0.0
        %815 = vmatpush.msra.mxu0 0.0
        %816 = vmatpush.msra.mxu0 0.0
        %817 = vmatpush.msra.mxu0 0.0
        %818 = vmatpush.msra.mxu0 0.0
        %819 = vmatpush.msra.mxu0 %v773
        %820 = vmatpush.msra.mxu0 %v747
        %821 = vmatpush.msra.mxu0 %v741
        %822 = vmatpush.msra.mxu0 %v735
        %823 = vmatmul.f32.gmra.mxu0 %v766
        %v824 = vpop.f32.mrf.mxu0
        %v825 = vadd.f32 %v762, %v824
        %826 = vdwg.mxu0
        %827 = vmatpush.msra.mxu0 0.0
        %828 = vmatpush.msra.mxu0 0.0
        %829 = vmatpush.msra.mxu0 0.0
        %830 = vmatpush.msra.mxu0 0.0
        %831 = vmatpush.msra.mxu0 0.0
        %832 = vmatpush.msra.mxu0 0.0
        %833 = vmatpush.msra.mxu0 0.0
        %834 = vmatpush.msra.mxu0 0.0
        %835 = vmatpush.msra.mxu0 0.0
        %836 = vmatpush.msra.mxu0 0.0
        %837 = vmatpush.msra.mxu0 0.0
        %838 = vmatpush.msra.mxu0 0.0
        %839 = vmatpush.msra.mxu0 %v776
        %840 = vmatpush.msra.mxu0 %v748
        %841 = vmatpush.msra.mxu0 %v742
        %842 = vmatpush.msra.mxu0 %v736
        %843 = vmatmul.f32.gmra.mxu0 %v766
        %v844 = vpop.f32.mrf.mxu0
        %v845 = vadd.f32 %v762, %v844
        %846 = vdwg.mxu0
        %847 = vmatpush.msra.mxu0 0.0
        %848 = vmatpush.msra.mxu0 0.0
        %849 = vmatpush.msra.mxu0 0.0
        %850 = vmatpush.msra.mxu0 0.0
        %851 = vmatpush.msra.mxu0 0.0
        %852 = vmatpush.msra.mxu0 0.0
        %853 = vmatpush.msra.mxu0 0.0
        %854 = vmatpush.msra.mxu0 0.0
        %855 = vmatpush.msra.mxu0 0.0
        %856 = vmatpush.msra.mxu0 0.0
        %857 = vmatpush.msra.mxu0 0.0
        %858 = vmatpush.msra.mxu0 0.0
        %859 = vmatpush.msra.mxu0 %v779
        %860 = vmatpush.msra.mxu0 %v749
        %861 = vmatpush.msra.mxu0 %v743
        %862 = vmatpush.msra.mxu0 %v737
        %863 = vmatmul.f32.gmra.mxu0 %v766
        %v864 = vpop.f32.mrf.mxu0
        %v865 = vadd.f32 %v762, %v864
        %866 = vdwg.mxu0
        %867 = vmatpush.msra.mxu0 0.0
        %868 = vmatpush.msra.mxu0 0.0
        %869 = vmatpush.msra.mxu0 0.0
        %870 = vmatpush.msra.mxu0 0.0
        %871 = vmatpush.msra.mxu0 0.0
        %872 = vmatpush.msra.mxu0 0.0
        %873 = vmatpush.msra.mxu0 0.0
        %874 = vmatpush.msra.mxu0 0.0
        %875 = vmatpush.msra.mxu0 0.0
        %876 = vmatpush.msra.mxu0 0.0
        %877 = vmatpush.msra.mxu0 0.0
        %878 = vmatpush.msra.mxu0 0.0
        %879 = vmatpush.msra.mxu0 %v782
        %880 = vmatpush.msra.mxu0 %v750
        %881 = vmatpush.msra.mxu0 %v744
        %882 = vmatpush.msra.mxu0 %v738
        %883 = vmatmul.f32.gmra.mxu0 %v766
        %v884 = vpop.f32.mrf.mxu0
        %v885 = vadd.f32 %v762, %v884
        %886 = vdwg.mxu0
        %887 = vmatpush.msra.mxu0 0.0
        %888 = vmatpush.msra.mxu0 0.0
        %889 = vmatpush.msra.mxu0 0.0
        %890 = vmatpush.msra.mxu0 0.0
        %891 = vmatpush.msra.mxu0 0.0
        %892 = vmatpush.msra.mxu0 0.0
        %893 = vmatpush.msra.mxu0 0.0
        %894 = vmatpush.msra.mxu0 0.0
        %895 = vmatpush.msra.mxu0 0.0
        %896 = vmatpush.msra.mxu0 0.0
        %897 = vmatpush.msra.mxu0 0.0
        %898 = vmatpush.msra.mxu0 0.0
        %899 = vmatpush.msra.mxu0 %v785
        %900 = vmatpush.msra.mxu0 %v751
        %901 = vmatpush.msra.mxu0 %v745
        %902 = vmatpush.msra.mxu0 %v739
        %903 = vmatmul.f32.gmra.mxu0 %v766
        %v904 = vpop.f32.mrf.mxu0
        %v905 = vadd.f32 %v762, %v904
        %906 = vdwg.mxu0
        %v907 = vmax.f32 %v805, 0.0
        %v908 = vmax.f32 %v825, 0.0
        %v909 = vmax.f32 %v845, 0.0
        %v910 = vmax.f32 %v865, 0.0
        %v911 = vmax.f32 %v885, 0.0
        %v912 = vmax.f32 %v905, 0.0
        %918 = vrot.lane.b32.xlu0 %v907, 127
        %v919 = vpop.permute.xlu0 %918
        %920 = vrot.lane.b32.xlu0 %v908, 127
        %v921 = vpop.permute.xlu0 %920
        %922 = vrot.lane.b32.xlu0 %v909, 127
        %v923 = vpop.permute.xlu0 %922
        %924 = vrot.lane.b32.xlu0 %v910, 127
        %v925 = vpop.permute.xlu0 %924
        %926 = vrot.lane.b32.xlu0 %v911, 127
        %v927 = vpop.permute.xlu0 %926
        %v928 = vsel %vm474, %v919, %v921
        %v929 = vsel %vm474, %v921, %v923
        %v930 = vsel %vm474, %v923, %v925
        %v931 = vsel %vm474, %v925, %v927
        %v937 = vmax.f32 %v907, %v928
        %v938 = vmax.f32 %v908, %v929
        %v939 = vmax.f32 %v909, %v930
        %v940 = vmax.f32 %v910, %v931
        %v941 = vmax.f32 %v911, %v927
        %943 = vrot.lane.b32.xlu0 %v912, 127
        %v944 = vpop.permute.xlu0 %943
        %v945 = vsel %vm474, %v927, %v944
        %v948 = vmax.f32 %v911, %v945
        %v949 = vmax.f32 %v912, %v944
        %956 = vrot.lane.b32.xlu0 %v937, 100
        %v957 = vpop.permute.xlu0 %956
        %958 = vrot.lane.b32.xlu0 %v938, 100
        %v959 = vpop.permute.xlu0 %958
        %960 = vrot.lane.b32.xlu0 %v939, 100
        %v961 = vpop.permute.xlu0 %960
        %962 = vrot.lane.b32.xlu0 %v940, 100
        %v963 = vpop.permute.xlu0 %962
        %964 = vrot.lane.b32.xlu0 %v948, 100
        %v965 = vpop.permute.xlu0 %964
        %966 = vrot.lane.b32.xlu0 %v949, 100
        %v967 = vpop.permute.xlu0 %966
        %v968 = vsel %vm518, %v957, %v959
        %v969 = vsel %vm518, %v959, %v961
        %v970 = vsel %vm518, %v961, %v963
        %v971 = vsel %vm518, %v963, %v965
        %v972 = vsel %vm518, %v965, %v967
        %v978 = vmax.f32 %v937, %v968
        %v979 = vmax.f32 %v938, %v969
        %v980 = vmax.f32 %v939, %v970
        %v981 = vmax.f32 %v940, %v971
        %v982 = vmax.f32 %v941, %v972
        %v983 = vld [vmem:[%s3] sm:$0xff]
        %v984 = vld [vmem:[%s3 + $0x8] sm:$0xff]
        %v985 = vld [vmem:[%s3 + $0x10] sm:$0xff]
        %v986 = vld [vmem:[%s3 + $0x18] sm:$0xff]
        %v987 = vld [vmem:[%s3 + $0x20] sm:$0xff]
        %v988 = vld [vmem:[%s3 + $0x28] sm:$0xff]
        %v989 = vld [vmem:[%s3 + $0x30] sm:$0xff]
        %v990 = vld [vmem:[%s3 + $0x38] sm:$0xff]
        %v991 = vld [vmem:[%s3 + $0x40] sm:$0xff]
        %v992 = vld [vmem:[%s3 + $0x48] sm:$0xff]
        %v993 = vld [vmem:[%s3 + $0x50] sm:$0xff]
        %v994 = vld [vmem:[%s3 + $0x58] sm:$0xff]
        %v995 = vld [vmem:[%s3 + $0x60] sm:$0xff]
        %v996 = vld [vmem:[%s3 + $0x68] sm:$0xff]
        %v997 = vld [vmem:[%s3 + $0x70] sm:$0xff]
        %v998 = vld [vmem:[%s3 + $0x78] sm:$0xff]
        %v999 = vld [vmem:[%s3 + $0x80] sm:$0xff]
        %v1000 = vld [vmem:[%s3 + $0x88] sm:$0xff]
        %v1001 = vld [vmem:[%s3 + $0x90] sm:$0xff]
        %v1002 = vld [vmem:[%s3 + $0x98] sm:$0xff]
        %v1003 = vld [vmem:[%s3 + $0xa0] sm:$0xff]
        %v1004 = vld [vmem:[%s3 + $0xa8] sm:$0xff]
        %v1005 = vld [vmem:[%s3 + $0xb0] sm:$0xff]
        %v1006 = vld [vmem:[%s3 + $0xb8] sm:$0xff]
        %v1007 = vld [vmem:[%s3 + $0xc0] sm:$0xff]
        %v1008 = vld [vmem:[%s3 + $0xc8] sm:$0xff]
        %v1009 = vld [vmem:[%s3 + $0xd0] sm:$0xff]
        %v1010 = vld [vmem:[%s3 + $0xd8] sm:$0xff]
        %v1011 = vld [vmem:[%s3 + $0xe0] sm:$0xff]
        %v1012 = vld [vmem:[%s3 + $0xe8] sm:$0xff]
        %v1013 = vld [vmem:[%s3 + $0xf0] sm:$0xff]
        %v1014 = vld [vmem:[%s3 + $0xf8] sm:$0xff]
        %v1015 = vld [vmem:[%s3 + $0x100] sm:$0xff]
        %v1016 = vld [vmem:[%s3 + $0x108] sm:$0xff]
        %v1017 = vld [vmem:[%s3 + $0x110] sm:$0xff]
        %v1018 = vld [vmem:[%s3 + $0x118] sm:$0xff]
        %v1019 = vld [vmem:[%s3 + $0x120] sm:$0xff]
        %v1020 = vld [vmem:[%s3 + $0x128] sm:$0xff]
        %v1021 = vld [vmem:[%s3 + $0x130] sm:$0xff]
        %v1022 = vld [vmem:[%s3 + $0x138] sm:$0xff]
        %v1023 = vld [vmem:[%s3 + $0x140] sm:$0xff]
        %v1024 = vld [vmem:[%s3 + $0x148] sm:$0xff]
        %v1025 = vld [vmem:[%s3 + $0x150] sm:$0xff]
        %v1026 = vld [vmem:[%s3 + $0x158] sm:$0xff]
        %v1027 = vld [vmem:[%s3 + $0x160] sm:$0xff]
        %v1028 = vld [vmem:[%s3 + $0x168] sm:$0xff]
        %v1029 = vld [vmem:[%s3 + $0x170] sm:$0xff]
        %v1030 = vld [vmem:[%s3 + $0x178] sm:$0xff]
        %v1031 = vld [vmem:[%s3 + $0x180] sm:$0xff]
        %v1032 = vld [vmem:[%s3 + $0x188] sm:$0xff]
        %v1033 = vld [vmem:[%s3 + $0x190] sm:$0xff]
        %v1034 = vld [vmem:[%s3 + $0x198] sm:$0xff]
        %v1035 = vld [vmem:[%s3 + $0x1a0] sm:$0xff]
        %v1036 = vld [vmem:[%s3 + $0x1a8] sm:$0xff]
        %v1037 = vld [vmem:[%s3 + $0x1b0] sm:$0xff]
        %v1038 = vld [vmem:[%s3 + $0x1b8] sm:$0xff]
        %v1039 = vld [vmem:[%s3 + $0x1c0] sm:$0xff]
        %v1040 = vld [vmem:[%s3 + $0x1c8] sm:$0xff]
        %v1041 = vld [vmem:[%s3 + $0x1d0] sm:$0xff]
        %v1042 = vld [vmem:[%s3 + $0x1d8] sm:$0xff]
        %v1043 = vld [vmem:[%s3 + $0x1e0] sm:$0xff]
        %v1044 = vld [vmem:[%s3 + $0x1e8] sm:$0xff]
        %v1045 = vld [vmem:[%s3 + $0x1f0] sm:$0xff]
        %v1046 = vld [vmem:[%s3 + $0x1f8] sm:$0xff]
        %v1047 = vld [vmem:[%s3 + $0x200] sm:$0xff]
        %v1048 = vld [vmem:[%s3 + $0x208] sm:$0xff]
        %v1049 = vld [vmem:[%s3 + $0x210] sm:$0xff]
        %v1050 = vld [vmem:[%s3 + $0x218] sm:$0xff]
        %v1051 = vld [vmem:[%s3 + $0x220] sm:$0xff]
        %v1052 = vld [vmem:[%s3 + $0x228] sm:$0xff]
        %v1053 = vld [vmem:[%s3 + $0x230] sm:$0xff]
        %v1054 = vld [vmem:[%s3 + $0x238] sm:$0xff]
        %v1055 = vld [vmem:[%s3 + $0x240] sm:$0xff]
        %v1056 = vld [vmem:[%s3 + $0x248] sm:$0xff]
        %v1057 = vld [vmem:[%s3 + $0x250] sm:$0xff]
        %v1058 = vld [vmem:[%s3 + $0x258] sm:$0xff]
        %v1059 = vld [vmem:[%s3 + $0x260] sm:$0xff]
        %v1060 = vld [vmem:[%s3 + $0x268] sm:$0xff]
        %v1061 = vld [vmem:[%s3 + $0x270] sm:$0xff]
        %v1062 = vld [vmem:[%s3 + $0x278] sm:$0xff]
        %v1063 = vld [vmem:[%s3 + $0x280] sm:$0xff]
        %v1064 = vld [vmem:[%s3 + $0x288] sm:$0xff]
        %v1065 = vld [vmem:[%s3 + $0x290] sm:$0xff]
        %v1066 = vld [vmem:[%s3 + $0x298] sm:$0xff]
        %v1067 = vld [vmem:[%s3 + $0x2a0] sm:$0xff]
        %v1068 = vld [vmem:[%s3 + $0x2a8] sm:$0xff]
        %v1069 = vld [vmem:[%s3 + $0x2b0] sm:$0xff]
        %v1070 = vld [vmem:[%s3 + $0x2b8] sm:$0xff]
        %v1071 = vld [vmem:[%s3 + $0x2c0] sm:$0xff]
        %v1072 = vld [vmem:[%s3 + $0x2c8] sm:$0xff]
        %v1073 = vld [vmem:[%s3 + $0x2d0] sm:$0xff]
        %v1074 = vld [vmem:[%s3 + $0x2d8] sm:$0xff]
        %v1075 = vld [vmem:[%s3 + $0x2e0] sm:$0xff]
        %v1076 = vld [vmem:[%s3 + $0x2e8] sm:$0xff]
        %v1077 = vld [vmem:[%s3 + $0x2f0] sm:$0xff]
        %v1078 = vld [vmem:[%s3 + $0x2f8] sm:$0xff]
        %v1079 = vld [vmem:[%s3 + $0x300] sm:$0xff]
        %v1080 = vld [vmem:[%s3 + $0x308] sm:$0xff]
        %v1081 = vld [vmem:[%s3 + $0x310] sm:$0xff]
        %v1082 = vld [vmem:[%s3 + $0x318] sm:$0xff]
        %v1083 = vld [vmem:[%s3 + $0x320] sm:$0xff]
        %v1084 = vld [vmem:[%s3 + $0x328] sm:$0xff]
        %v1085 = vld [vmem:[%s3 + $0x330] sm:$0xff]
        %v1086 = vld [vmem:[%s3 + $0x338] sm:$0xff]
        %v1087 = vld [vmem:[%s3 + $0x340] sm:$0xff]
        %v1088 = vld [vmem:[%s3 + $0x348] sm:$0xff]
        %v1089 = vld [vmem:[%s3 + $0x350] sm:$0xff]
        %v1090 = vld [vmem:[%s3 + $0x358] sm:$0xff]
        %v1091 = vld [vmem:[%s3 + $0x360] sm:$0xff]
        %v1092 = vld [vmem:[%s3 + $0x368] sm:$0xff]
        %v1093 = vld [vmem:[%s3 + $0x370] sm:$0xff]
        %v1094 = vld [vmem:[%s3 + $0x378] sm:$0xff]
        %v1095 = vld [vmem:[%s3 + $0x380] sm:$0xff]
        %v1096 = vld [vmem:[%s3 + $0x388] sm:$0xff]
        %v1097 = vld [vmem:[%s3 + $0x390] sm:$0xff]
        %v1098 = vld [vmem:[%s3 + $0x398] sm:$0xff]
        %v1099 = vld [vmem:[%s3 + $0x3a0] sm:$0xff]
        %v1100 = vld [vmem:[%s3 + $0x3a8] sm:$0xff]
        %v1101 = vld [vmem:[%s3 + $0x3b0] sm:$0xff]
        %v1102 = vld [vmem:[%s3 + $0x3b8] sm:$0xff]
        %v1103 = vld [vmem:[%s3 + $0x3c0] sm:$0xff]
        %v1104 = vld [vmem:[%s3 + $0x3c8] sm:$0xff]
        %v1105 = vld [vmem:[%s3 + $0x3d0] sm:$0xff]
        %v1106 = vld [vmem:[%s3 + $0x3d8] sm:$0xff]
        %v1107 = vld [vmem:[%s3 + $0x3e0] sm:$0xff]
        %v1108 = vld [vmem:[%s3 + $0x3e8] sm:$0xff]
        %v1109 = vld [vmem:[%s3 + $0x3f0] sm:$0xff]
        %v1110 = vld [vmem:[%s3 + $0x3f8] sm:$0xff]
        %v1111 = vld [vmem:[%s3 + $0x400] sm:$0xff]
        %v1112 = vld [vmem:[%s3 + $0x408] sm:$0xff]
        %v1113 = vld [vmem:[%s3 + $0x410] sm:$0xff]
        %v1114 = vld [vmem:[%s3 + $0x418] sm:$0xff]
        %v1115 = vld [vmem:[%s3 + $0x420] sm:$0xff]
        %v1116 = vld [vmem:[%s3 + $0x428] sm:$0xff]
        %v1117 = vld [vmem:[%s3 + $0x430] sm:$0xff]
        %v1118 = vld [vmem:[%s3 + $0x438] sm:$0xff]
        %v1119 = vld [vmem:[%s3 + $0x440] sm:$0xff]
        %v1120 = vld [vmem:[%s3 + $0x448] sm:$0xff]
        %v1121 = vld [vmem:[%s3 + $0x450] sm:$0xff]
        %v1122 = vld [vmem:[%s3 + $0x458] sm:$0xff]
        %v1123 = vld [vmem:[%s3 + $0x460] sm:$0xff]
        %v1124 = vld [vmem:[%s3 + $0x468] sm:$0xff]
        %v1125 = vld [vmem:[%s3 + $0x470] sm:$0xff]
        %v1126 = vld [vmem:[%s3 + $0x478] sm:$0xff]
        %v1127 = vld [vmem:[%s3 + $0x480] sm:$0xff]
        %v1128 = vld [vmem:[%s3 + $0x488] sm:$0xff]
        %v1129 = vld [vmem:[%s3 + $0x490] sm:$0xff]
        %v1130 = vld [vmem:[%s3 + $0x498] sm:$0xff]
        %v1131 = vld [vmem:[%s3 + $0x4a0] sm:$0xff]
        %v1132 = vld [vmem:[%s3 + $0x4a8] sm:$0xff]
        %v1133 = vld [vmem:[%s3 + $0x4b0] sm:$0xff]
        %v1134 = vld [vmem:[%s3 + $0x4b8] sm:$0xff]
        %v1135 = vld [vmem:[%s3 + $0x4c0] sm:$0xff]
        %v1136 = vld [vmem:[%s3 + $0x4c8] sm:$0xff]
        %v1137 = vld [vmem:[%s3 + $0x4d0] sm:$0xff]
        %v1138 = vld [vmem:[%s3 + $0x4d8] sm:$0xff]
        %v1139 = vld [vmem:[%s3 + $0x4e0] sm:$0xff]
        %v1140 = vld [vmem:[%s3 + $0x4e8] sm:$0xff]
        %v1141 = vld [vmem:[%s3 + $0x4f0] sm:$0x7f]
        %v1142 = vld [vmem:[%s3 + $0x4f8] sm:$0x7f]
        %v1144 = vsel %vm474, %v982, 0
        %vm1146 = vcmask 1046528
        %v1148 = vsel %vm1146, %v1141, 0
        %v1151 = vsel %vm1146, %v1142, 0
        %1153 = vmatpush.msra.mxu0 %v1013
        %1154 = vmatpush.msra.mxu0 %v1011
        %1155 = vmatpush.msra.mxu0 %v1009
        %1156 = vmatpush.msra.mxu0 %v1007
        %1157 = vmatpush.msra.mxu0 %v1005
        %1158 = vmatpush.msra.mxu0 %v1003
        %1159 = vmatpush.msra.mxu0 %v1001
        %1160 = vmatpush.msra.mxu0 %v999
        %1161 = vmatpush.msra.mxu0 %v997
        %1162 = vmatpush.msra.mxu0 %v995
        %1163 = vmatpush.msra.mxu0 %v993
        %1164 = vmatpush.msra.mxu0 %v991
        %1165 = vmatpush.msra.mxu0 %v989
        %1166 = vmatpush.msra.mxu0 %v987
        %1167 = vmatpush.msra.mxu0 %v985
        %1168 = vmatpush.msra.mxu0 %v983
        %1169 = vmatmul.f32.gmra.mxu0 %v978
        %v1170 = vpop.f32.mrf.mxu0
        %v1171 = vadd.f32 0.0, %v1170
        %1172 = vdwg.mxu0
        %1173 = vmatpush.msra.mxu0 %v1045
        %1174 = vmatpush.msra.mxu0 %v1043
        %1175 = vmatpush.msra.mxu0 %v1041
        %1176 = vmatpush.msra.mxu0 %v1039
        %1177 = vmatpush.msra.mxu0 %v1037
        %1178 = vmatpush.msra.mxu0 %v1035
        %1179 = vmatpush.msra.mxu0 %v1033
        %1180 = vmatpush.msra.mxu0 %v1031
        %1181 = vmatpush.msra.mxu0 %v1029
        %1182 = vmatpush.msra.mxu0 %v1027
        %1183 = vmatpush.msra.mxu0 %v1025
        %1184 = vmatpush.msra.mxu0 %v1023
        %1185 = vmatpush.msra.mxu0 %v1021
        %1186 = vmatpush.msra.mxu0 %v1019
        %1187 = vmatpush.msra.mxu0 %v1017
        %1188 = vmatpush.msra.mxu0 %v1015
        %1189 = vmatmul.f32.gmra.mxu0 %v979
        %v1190 = vpop.f32.mrf.mxu0
        %v1191 = vadd.f32 %v1171, %v1190
        %1192 = vdwg.mxu0
        %1193 = vmatpush.msra.mxu0 %v1077
        %1194 = vmatpush.msra.mxu0 %v1075
        %1195 = vmatpush.msra.mxu0 %v1073
        %1196 = vmatpush.msra.mxu0 %v1071
        %1197 = vmatpush.msra.mxu0 %v1069
        %1198 = vmatpush.msra.mxu0 %v1067
        %1199 = vmatpush.msra.mxu0 %v1065
        %1200 = vmatpush.msra.mxu0 %v1063
        %1201 = vmatpush.msra.mxu0 %v1061
        %1202 = vmatpush.msra.mxu0 %v1059
        %1203 = vmatpush.msra.mxu0 %v1057
        %1204 = vmatpush.msra.mxu0 %v1055
        %1205 = vmatpush.msra.mxu0 %v1053
        %1206 = vmatpush.msra.mxu0 %v1051
        %1207 = vmatpush.msra.mxu0 %v1049
        %1208 = vmatpush.msra.mxu0 %v1047
        %1209 = vmatmul.f32.gmra.mxu0 %v980
        %v1210 = vpop.f32.mrf.mxu0
        %v1211 = vadd.f32 %v1191, %v1210
        %1212 = vdwg.mxu0
        %1213 = vmatpush.msra.mxu0 %v1109
        %1214 = vmatpush.msra.mxu0 %v1107
        %1215 = vmatpush.msra.mxu0 %v1105
        %1216 = vmatpush.msra.mxu0 %v1103
        %1217 = vmatpush.msra.mxu0 %v1101
        %1218 = vmatpush.msra.mxu0 %v1099
        %1219 = vmatpush.msra.mxu0 %v1097
        %1220 = vmatpush.msra.mxu0 %v1095
        %1221 = vmatpush.msra.mxu0 %v1093
        %1222 = vmatpush.msra.mxu0 %v1091
        %1223 = vmatpush.msra.mxu0 %v1089
        %1224 = vmatpush.msra.mxu0 %v1087
        %1225 = vmatpush.msra.mxu0 %v1085
        %1226 = vmatpush.msra.mxu0 %v1083
        %1227 = vmatpush.msra.mxu0 %v1081
        %1228 = vmatpush.msra.mxu0 %v1079
        %1229 = vmatmul.f32.gmra.mxu0 %v981
        %v1230 = vpop.f32.mrf.mxu0
        %v1231 = vadd.f32 %v1211, %v1230
        %1232 = vdwg.mxu0
        %1233 = vmatpush.msra.mxu0 %v1148
        %1234 = vmatpush.msra.mxu0 %v1139
        %1235 = vmatpush.msra.mxu0 %v1137
        %1236 = vmatpush.msra.mxu0 %v1135
        %1237 = vmatpush.msra.mxu0 %v1133
        %1238 = vmatpush.msra.mxu0 %v1131
        %1239 = vmatpush.msra.mxu0 %v1129
        %1240 = vmatpush.msra.mxu0 %v1127
        %1241 = vmatpush.msra.mxu0 %v1125
        %1242 = vmatpush.msra.mxu0 %v1123
        %1243 = vmatpush.msra.mxu0 %v1121
        %1244 = vmatpush.msra.mxu0 %v1119
        %1245 = vmatpush.msra.mxu0 %v1117
        %1246 = vmatpush.msra.mxu0 %v1115
        %1247 = vmatpush.msra.mxu0 %v1113
        %1248 = vmatpush.msra.mxu0 %v1111
        %1249 = vmatmul.f32.gmra.mxu0 %v1144
        %v1250 = vpop.f32.mrf.mxu0
        %v1251 = vadd.f32 %v1231, %v1250
        %1252 = vdwg.mxu0
        %1253 = vmatpush.msra.mxu0 %v1014
        %1254 = vmatpush.msra.mxu0 %v1012
        %1255 = vmatpush.msra.mxu0 %v1010
        %1256 = vmatpush.msra.mxu0 %v1008
        %1257 = vmatpush.msra.mxu0 %v1006
        %1258 = vmatpush.msra.mxu0 %v1004
        %1259 = vmatpush.msra.mxu0 %v1002
        %1260 = vmatpush.msra.mxu0 %v1000
        %1261 = vmatpush.msra.mxu0 %v998
        %1262 = vmatpush.msra.mxu0 %v996
        %1263 = vmatpush.msra.mxu0 %v994
        %1264 = vmatpush.msra.mxu0 %v992
        %1265 = vmatpush.msra.mxu0 %v990
        %1266 = vmatpush.msra.mxu0 %v988
        %1267 = vmatpush.msra.mxu0 %v986
        %1268 = vmatpush.msra.mxu0 %v984
        %1269 = vmatmul.f32.gmra.mxu0 %v978
        %v1270 = vpop.f32.mrf.mxu0
        %v1271 = vadd.f32 0.0, %v1270
        %1272 = vdwg.mxu0
        %1273 = vmatpush.msra.mxu0 %v1046
        %1274 = vmatpush.msra.mxu0 %v1044
        %1275 = vmatpush.msra.mxu0 %v1042
        %1276 = vmatpush.msra.mxu0 %v1040
        %1277 = vmatpush.msra.mxu0 %v1038
        %1278 = vmatpush.msra.mxu0 %v1036
        %1279 = vmatpush.msra.mxu0 %v1034
        %1280 = vmatpush.msra.mxu0 %v1032
        %1281 = vmatpush.msra.mxu0 %v1030
        %1282 = vmatpush.msra.mxu0 %v1028
        %1283 = vmatpush.msra.mxu0 %v1026
        %1284 = vmatpush.msra.mxu0 %v1024
        %1285 = vmatpush.msra.mxu0 %v1022
        %1286 = vmatpush.msra.mxu0 %v1020
        %1287 = vmatpush.msra.mxu0 %v1018
        %1288 = vmatpush.msra.mxu0 %v1016
        %1289 = vmatmul.f32.gmra.mxu0 %v979
        %v1290 = vpop.f32.mrf.mxu0
        %v1291 = vadd.f32 %v1271, %v1290
        %1292 = vdwg.mxu0
        %1293 = vmatpush.msra.mxu0 %v1078
        %1294 = vmatpush.msra.mxu0 %v1076
        %1295 = vmatpush.msra.mxu0 %v1074
        %1296 = vmatpush.msra.mxu0 %v1072
        %1297 = vmatpush.msra.mxu0 %v1070
        %1298 = vmatpush.msra.mxu0 %v1068
        %1299 = vmatpush.msra.mxu0 %v1066
        %1300 = vmatpush.msra.mxu0 %v1064
        %1301 = vmatpush.msra.mxu0 %v1062
        %1302 = vmatpush.msra.mxu0 %v1060
        %1303 = vmatpush.msra.mxu0 %v1058
        %1304 = vmatpush.msra.mxu0 %v1056
        %1305 = vmatpush.msra.mxu0 %v1054
        %1306 = vmatpush.msra.mxu0 %v1052
        %1307 = vmatpush.msra.mxu0 %v1050
        %1308 = vmatpush.msra.mxu0 %v1048
        %1309 = vmatmul.f32.gmra.mxu0 %v980
        %v1310 = vpop.f32.mrf.mxu0
        %v1311 = vadd.f32 %v1291, %v1310
        %1312 = vdwg.mxu0
        %1313 = vmatpush.msra.mxu0 %v1110
        %1314 = vmatpush.msra.mxu0 %v1108
        %1315 = vmatpush.msra.mxu0 %v1106
        %1316 = vmatpush.msra.mxu0 %v1104
        %1317 = vmatpush.msra.mxu0 %v1102
        %1318 = vmatpush.msra.mxu0 %v1100
        %1319 = vmatpush.msra.mxu0 %v1098
        %1320 = vmatpush.msra.mxu0 %v1096
        %1321 = vmatpush.msra.mxu0 %v1094
        %1322 = vmatpush.msra.mxu0 %v1092
        %1323 = vmatpush.msra.mxu0 %v1090
        %1324 = vmatpush.msra.mxu0 %v1088
        %1325 = vmatpush.msra.mxu0 %v1086
        %1326 = vmatpush.msra.mxu0 %v1084
        %1327 = vmatpush.msra.mxu0 %v1082
        %1328 = vmatpush.msra.mxu0 %v1080
        %1329 = vmatmul.f32.gmra.mxu0 %v981
        %v1330 = vpop.f32.mrf.mxu0
        %v1331 = vadd.f32 %v1311, %v1330
        %1332 = vdwg.mxu0
        %1333 = vmatpush.msra.mxu0 %v1151
        %1334 = vmatpush.msra.mxu0 %v1140
        %1335 = vmatpush.msra.mxu0 %v1138
        %1336 = vmatpush.msra.mxu0 %v1136
        %1337 = vmatpush.msra.mxu0 %v1134
        %1338 = vmatpush.msra.mxu0 %v1132
        %1339 = vmatpush.msra.mxu0 %v1130
        %1340 = vmatpush.msra.mxu0 %v1128
        %1341 = vmatpush.msra.mxu0 %v1126
        %1342 = vmatpush.msra.mxu0 %v1124
        %1343 = vmatpush.msra.mxu0 %v1122
        %1344 = vmatpush.msra.mxu0 %v1120
        %1345 = vmatpush.msra.mxu0 %v1118
        %1346 = vmatpush.msra.mxu0 %v1116
        %1347 = vmatpush.msra.mxu0 %v1114
        %1348 = vmatpush.msra.mxu0 %v1112
        %1349 = vmatmul.f32.gmra.mxu0 %v1144
        %v1350 = vpop.f32.mrf.mxu0
        %v1351 = vadd.f32 %v1331, %v1350
        %1352 = vdwg.mxu0
        %vm1353 = vcmask 750592
        %1354 = vst.msk [vmem:[#allocation3] sm:$0x3f] %vm1353, %v1251
        %1356 = vrot.lane.b32.xlu0 %v1251, 127
        %v1357 = vpop.permute.xlu0 %1356
        %1359 = vst.msk [vmem:[#allocation3 + $0x6] sm:$0x3f] %vm1353, %v1357
        %1360 = vrot.lane.b32.xlu0 %v1251, 126
        %v1361 = vpop.permute.xlu0 %1360
        %1363 = vst.msk [vmem:[#allocation3 + $0xc] sm:$0x3f] %vm1353, %v1361
        %1364 = vrot.lane.b32.xlu0 %v1251, 125
        %v1365 = vpop.permute.xlu0 %1364
        %1367 = vst.msk [vmem:[#allocation3 + $0x12] sm:$0x3f] %vm1353, %v1365
        %1368 = vrot.lane.b32.xlu0 %v1251, 124
        %v1369 = vpop.permute.xlu0 %1368
        %1371 = vst.msk [vmem:[#allocation3 + $0x18] sm:$0x3f] %vm1353, %v1369
        %1372 = vrot.lane.b32.xlu0 %v1251, 116
        %v1373 = vpop.permute.xlu0 %1372
        %1375 = vst.msk [vmem:[#allocation3 + $0x1e] sm:$0x3f] %vm1353, %v1373
        %1376 = vrot.lane.b32.xlu0 %v1251, 115
        %v1377 = vpop.permute.xlu0 %1376
        %1379 = vst.msk [vmem:[#allocation3 + $0x24] sm:$0x3f] %vm1353, %v1377
        %1380 = vrot.lane.b32.xlu0 %v1251, 114
        %v1381 = vpop.permute.xlu0 %1380
        %1383 = vst.msk [vmem:[#allocation3 + $0x2a] sm:$0x3f] %vm1353, %v1381
        %1384 = vrot.lane.b32.xlu0 %v1251, 113
        %v1385 = vpop.permute.xlu0 %1384
        %1387 = vst.msk [vmem:[#allocation3 + $0x30] sm:$0x3f] %vm1353, %v1385
        %1388 = vrot.lane.b32.xlu0 %v1251, 112
        %v1389 = vpop.permute.xlu0 %1388
        %1391 = vst.msk [vmem:[#allocation3 + $0x36] sm:$0x3f] %vm1353, %v1389
        %1392 = vrot.lane.b32.xlu0 %v1251, 104
        %v1393 = vpop.permute.xlu0 %1392
        %1395 = vst.msk [vmem:[#allocation3 + $0x3c] sm:$0x3f] %vm1353, %v1393
        %1396 = vrot.lane.b32.xlu0 %v1251, 103
        %v1397 = vpop.permute.xlu0 %1396
        %1399 = vst.msk [vmem:[#allocation3 + $0x42] sm:$0x3f] %vm1353, %v1397
        %1400 = vrot.lane.b32.xlu0 %v1251, 102
        %v1401 = vpop.permute.xlu0 %1400
        %1403 = vst.msk [vmem:[#allocation3 + $0x48] sm:$0x3f] %vm1353, %v1401
        %1404 = vrot.lane.b32.xlu0 %v1251, 101
        %v1405 = vpop.permute.xlu0 %1404
        %1407 = vst.msk [vmem:[#allocation3 + $0x4e] sm:$0x3f] %vm1353, %v1405
        %1408 = vrot.lane.b32.xlu0 %v1251, 100
        %v1409 = vpop.permute.xlu0 %1408
        %1411 = vst.msk [vmem:[#allocation3 + $0x54] sm:$0x3f] %vm1353, %v1409
        %1412 = vrot.lane.b32.xlu0 %v1251, 92
        %v1413 = vpop.permute.xlu0 %1412
        %1415 = vst.msk [vmem:[#allocation3 + $0x5a] sm:$0x3f] %vm1353, %v1413
        %1417 = vrot.lane.b32.xlu0 %v1251, 91
        %v1418 = vpop.permute.xlu0 %1417
        %1419 = vrot.lane.b32.xlu0 %v1351, 91
        %v1420 = vpop.permute.xlu0 %1419
        %vm1421 = vcmask 744448
        %v1422 = vsel %vm1421, %v1418, %v1420
        %1424 = vst.msk [vmem:[#allocation3 + $0x60] sm:$0x3f] %vm1353, %v1422
        %1425 = vrot.lane.b32.xlu0 %v1251, 90
        %v1426 = vpop.permute.xlu0 %1425
        %1427 = vrot.lane.b32.xlu0 %v1351, 90
        %v1428 = vpop.permute.xlu0 %1427
        %vm1429 = vcmask 736256
        %v1430 = vsel %vm1429, %v1426, %v1428
        %1432 = vst.msk [vmem:[#allocation3 + $0x66] sm:$0x3f] %vm1353, %v1430
        %1433 = vrot.lane.b32.xlu0 %v1251, 89
        %v1434 = vpop.permute.xlu0 %1433
        %1435 = vrot.lane.b32.xlu0 %v1351, 89
        %v1436 = vpop.permute.xlu0 %1435
        %vm1437 = vcmask 728064
        %v1438 = vsel %vm1437, %v1434, %v1436
        %1440 = vst.msk [vmem:[#allocation3 + $0x6c] sm:$0x3f] %vm1353, %v1438
        %1441 = vrot.lane.b32.xlu0 %v1251, 88
        %v1442 = vpop.permute.xlu0 %1441
        %1443 = vrot.lane.b32.xlu0 %v1351, 88
        %v1444 = vpop.permute.xlu0 %1443
        %vm1445 = vcmask 719872
        %v1446 = vsel %vm1445, %v1442, %v1444
        %1448 = vst.msk [vmem:[#allocation3 + $0x72] sm:$0x3f] %vm1353, %v1446
        %1449 = vrot.lane.b32.xlu0 %v1251, 80
        %v1450 = vpop.permute.xlu0 %1449
        %1451 = vrot.lane.b32.xlu0 %v1351, 80
        %v1452 = vpop.permute.xlu0 %1451
        %vm1453 = vcmask 654336
        %v1454 = vsel %vm1453, %v1450, %v1452
        %1456 = vst.msk [vmem:[#allocation3 + $0x78] sm:$0x3f] %vm1353, %v1454
        %1457 = vrot.lane.b32.xlu0 %v1251, 79
        %v1458 = vpop.permute.xlu0 %1457
        %1459 = vrot.lane.b32.xlu0 %v1351, 79
        %v1460 = vpop.permute.xlu0 %1459
        %vm1461 = vcmask 646144
        %v1462 = vsel %vm1461, %v1458, %v1460
        %1464 = vst.msk [vmem:[#allocation3 + $0x7e] sm:$0x3f] %vm1353, %v1462
        %1465 = vrot.lane.b32.xlu0 %v1251, 78
        %v1466 = vpop.permute.xlu0 %1465
        %1467 = vrot.lane.b32.xlu0 %v1351, 78
        %v1468 = vpop.permute.xlu0 %1467
        %vm1469 = vcmask 637952
        %v1470 = vsel %vm1469, %v1466, %v1468
        %1472 = vst.msk [vmem:[#allocation3 + $0x84] sm:$0x3f] %vm1353, %v1470
        %1473 = vrot.lane.b32.xlu0 %v1251, 77
        %v1474 = vpop.permute.xlu0 %1473
        %1475 = vrot.lane.b32.xlu0 %v1351, 77
        %v1476 = vpop.permute.xlu0 %1475
        %vm1477 = vcmask 629760
        %v1478 = vsel %vm1477, %v1474, %v1476
        %1480 = vst.msk [vmem:[#allocation3 + $0x8a] sm:$0x3f] %vm1353, %v1478
        %1481 = vrot.lane.b32.xlu0 %v1251, 76
        %v1482 = vpop.permute.xlu0 %1481
        %1483 = vrot.lane.b32.xlu0 %v1351, 76
        %v1484 = vpop.permute.xlu0 %1483
        %vm1485 = vcmask 621568
        %v1486 = vsel %vm1485, %v1482, %v1484
        %1488 = vst.msk [vmem:[#allocation3 + $0x90] sm:$0x3f] %vm1353, %v1486
        %v1489 = vld [vmem:[%s4] sm:$0xff]
        %v1490 = vld [vmem:[%s4 + $0x8] sm:$0xff]
        %v1491 = vld [vmem:[%s4 + $0x10] sm:$0xff]
        %v1492 = vld [vmem:[%s4 + $0x18] sm:$0xff]
        %v1493 = vld [vmem:[#allocation3] sm:$0xff]
        %v1494 = vld [vmem:[#allocation3 + $0x8] sm:$0xff]
        %v1495 = vld [vmem:[#allocation3 + $0x10] sm:$0xff]
        %v1496 = vld [vmem:[#allocation3 + $0x18] sm:$0xff]
        %v1497 = vld [vmem:[#allocation3 + $0x20] sm:$0xff]
        %v1498 = vld [vmem:[#allocation3 + $0x28] sm:$0xff]
        %v1499 = vld [vmem:[#allocation3 + $0x30] sm:$0xff]
        %v1500 = vld [vmem:[#allocation3 + $0x38] sm:$0xff]
        %v1501 = vld [vmem:[#allocation3 + $0x40] sm:$0xff]
        %v1502 = vld [vmem:[#allocation3 + $0x48] sm:$0xff]
        %v1503 = vld [vmem:[#allocation3 + $0x50] sm:$0xff]
        %v1504 = vld [vmem:[#allocation3 + $0x58] sm:$0xff]
        %v1505 = vld [vmem:[#allocation3 + $0x60] sm:$0xff]
        %v1506 = vld [vmem:[#allocation3 + $0x68] sm:$0xff]
        %v1507 = vld [vmem:[#allocation3 + $0x70] sm:$0xff]
        %v1508 = vld [vmem:[#allocation3 + $0x78] sm:$0xff]
        %v1509 = vld [vmem:[#allocation3 + $0x80] sm:$0xff]
        %v1510 = vld [vmem:[#allocation3 + $0x88] sm:$0xff]
        %v1511 = vld [vmem:[#allocation3 + $0x90] sm:$0x3f]
        %v1512 = vld [vmem:[%s5] sm:$0xff]
        %v1513 = vld [vmem:[%s5 + $0x8] sm:$0xff]
        %1515 = vset.pattern.permute.xlu0 0
        %1516 = vperm.xlu0 %1515, %v1512
        %v1517 = vpop.permute.xlu0 %1516
        %1520 = vset.pattern.permute.xlu0 0
        %1521 = vperm.xlu0 %1520, %v1513
        %v1522 = vpop.permute.xlu0 %1521
        %vm1524 = vcmask 179200
        %v1526 = vsel %vm1524, %v1490, 0
        %v1529 = vsel %vm1524, %v1492, 0
        %vm1531 = vcmask 1045504
        %v1533 = vsel %vm1531, %v1511, 0
        %1535 = vmatpush.msra.mxu0 %v1508
        %1536 = vmatpush.msra.mxu0 %v1507
        %1537 = vmatpush.msra.mxu0 %v1506
        %1538 = vmatpush.msra.mxu0 %v1505
        %1539 = vmatpush.msra.mxu0 %v1504
        %1540 = vmatpush.msra.mxu0 %v1503
        %1541 = vmatpush.msra.mxu0 %v1502
        %1542 = vmatpush.msra.mxu0 %v1501
        %1543 = vmatpush.msra.mxu0 %v1500
        %1544 = vmatpush.msra.mxu0 %v1499
        %1545 = vmatpush.msra.mxu0 %v1498
        %1546 = vmatpush.msra.mxu0 %v1497
        %1547 = vmatpush.msra.mxu0 %v1496
        %1548 = vmatpush.msra.mxu0 %v1495
        %1549 = vmatpush.msra.mxu0 %v1494
        %1550 = vmatpush.msra.mxu0 %v1493
        %1551 = vmatmul.f32.gmra.mxu0 %v1489
        %v1552 = vpop.f32.mrf.mxu0
        %v1553 = vadd.f32 %v1517, %v1552
        %1554 = vmatmul.f32.gmra.mxu0 %v1491
        %v1555 = vpop.f32.mrf.mxu0
        %v1556 = vadd.f32 %v1522, %v1555
        %1557 = vdwg.mxu0
        %1558 = vmatpush.msra.mxu0 0.0
        %1559 = vmatpush.msra.mxu0 0.0
        %1560 = vmatpush.msra.mxu0 0.0
        %1561 = vmatpush.msra.mxu0 0.0
        %1562 = vmatpush.msra.mxu0 0.0
        %1563 = vmatpush.msra.mxu0 0.0
        %1564 = vmatpush.msra.mxu0 0.0
        %1565 = vmatpush.msra.mxu0 0.0
        %1566 = vmatpush.msra.mxu0 0.0
        %1567 = vmatpush.msra.mxu0 0.0
        %1568 = vmatpush.msra.mxu0 0.0
        %1569 = vmatpush.msra.mxu0 0.0
        %1570 = vmatpush.msra.mxu0 0.0
        %1571 = vmatpush.msra.mxu0 %v1533
        %1572 = vmatpush.msra.mxu0 %v1510
        %1573 = vmatpush.msra.mxu0 %v1509
        %1574 = vmatmul.f32.gmra.mxu0 %v1526
        %v1575 = vpop.f32.mrf.mxu0
        %v1576 = vadd.f32 %v1553, %v1575
        %1577 = vmatmul.f32.gmra.mxu0 %v1529
        %v1578 = vpop.f32.mrf.mxu0
        %v1579 = vadd.f32 %v1556, %v1578
        %1580 = vdwg.mxu0
        %v1581 = vmax.f32 %v1576, 0.0
        %v1582 = vmax.f32 %v1579, 0.0
        %1585 = vrot.lane.b32.xlu0 %v1581, 127
        %v1586 = vpop.permute.xlu0 %1585
        %1587 = vrot.lane.b32.xlu0 %v1582, 127
        %v1588 = vpop.permute.xlu0 %1587
        %v1591 = vmax.f32 %v1581, %v1586
        %v1592 = vmax.f32 %v1582, %v1588
        %1595 = vrot.lane.b32.xlu0 %v1591, 116
        %v1596 = vpop.permute.xlu0 %1595
        %1597 = vrot.lane.b32.xlu0 %v1592, 116
        %v1598 = vpop.permute.xlu0 %1597
        %v1601 = vmax.f32 %v1591, %v1596
        %v1602 = vmax.f32 %v1592, %v1598
        %v1603 = vld [vmem:[%s6] sm:$0xff]
        %v1604 = vld [vmem:[%s6 + $0x8] sm:$0xff]
        %v1605 = vld [vmem:[%s6 + $0x10] sm:$0xff]
        %v1606 = vld [vmem:[%s6 + $0x18] sm:$0xff]
        %v1607 = vld [vmem:[%s6 + $0x20] sm:$0xff]
        %v1608 = vld [vmem:[%s6 + $0x28] sm:$0xff]
        %v1609 = vld [vmem:[%s6 + $0x30] sm:$0xff]
        %v1610 = vld [vmem:[%s6 + $0x38] sm:$0xff]
        %v1611 = vld [vmem:[%s6 + $0x40] sm:$0xff]
        %v1612 = vld [vmem:[%s6 + $0x48] sm:$0xff]
        %v1613 = vld [vmem:[%s6 + $0x50] sm:$0xff]
        %v1614 = vld [vmem:[%s6 + $0x58] sm:$0xff]
        %v1615 = vld [vmem:[%s6 + $0x60] sm:$0xff]
        %v1616 = vld [vmem:[%s6 + $0x68] sm:$0xff]
        %v1617 = vld [vmem:[%s6 + $0x70] sm:$0xff]
        %v1618 = vld [vmem:[%s6 + $0x78] sm:$0xff]
        %v1619 = vld [vmem:[%s6 + $0x80] sm:$0xff]
        %v1620 = vld [vmem:[%s6 + $0x88] sm:$0xff]
        %v1621 = vld [vmem:[%s6 + $0x90] sm:$0x7f]
        %v1622 = vld [vmem:[%s6 + $0x98] sm:$0x7f]
        %v1624 = vsel %vm1461, %v1601, 0
        %v1627 = vsel %vm1461, %v1602, 0
        %v1630 = vsel %vm1146, %v1621, 0
        %v1633 = vsel %vm1146, %v1622, 0
        %1635 = vmatpush.msra.mxu0 0.0
        %1636 = vmatpush.msra.mxu0 0.0
        %1637 = vmatpush.msra.mxu0 0.0
        %1638 = vmatpush.msra.mxu0 0.0
        %1639 = vmatpush.msra.mxu0 0.0
        %1640 = vmatpush.msra.mxu0 0.0
        %1641 = vmatpush.msra.mxu0 %v1630
        %1642 = vmatpush.msra.mxu0 %v1619
        %1643 = vmatpush.msra.mxu0 %v1617
        %1644 = vmatpush.msra.mxu0 %v1615
        %1645 = vmatpush.msra.mxu0 %v1613
        %1646 = vmatpush.msra.mxu0 %v1611
        %1647 = vmatpush.msra.mxu0 %v1609
        %1648 = vmatpush.msra.mxu0 %v1607
        %1649 = vmatpush.msra.mxu0 %v1605
        %1650 = vmatpush.msra.mxu0 %v1603
        %1651 = vmatmul.f32.gmra.mxu0 %v1624
        %v1652 = vpop.f32.mrf.mxu0
        %v1653 = vadd.f32 0.0, %v1652
        %1654 = vmatmul.f32.gmra.mxu0 %v1627
        %v1655 = vpop.f32.mrf.mxu0
        %v1656 = vadd.f32 0.0, %v1655
        %1657 = vdwg.mxu0
        %1658 = vmatpush.msra.mxu0 0.0
        %1659 = vmatpush.msra.mxu0 0.0
        %1660 = vmatpush.msra.mxu0 0.0
        %1661 = vmatpush.msra.mxu0 0.0
        %1662 = vmatpush.msra.mxu0 0.0
        %1663 = vmatpush.msra.mxu0 0.0
        %1664 = vmatpush.msra.mxu0 %v1633
        %1665 = vmatpush.msra.mxu0 %v1620
        %1666 = vmatpush.msra.mxu0 %v1618
        %1667 = vmatpush.msra.mxu0 %v1616
        %1668 = vmatpush.msra.mxu0 %v1614
        %1669 = vmatpush.msra.mxu0 %v1612
        %1670 = vmatpush.msra.mxu0 %v1610
        %1671 = vmatpush.msra.mxu0 %v1608
        %1672 = vmatpush.msra.mxu0 %v1606
        %1673 = vmatpush.msra.mxu0 %v1604
        %1674 = vmatmul.f32.gmra.mxu0 %v1624
        %v1675 = vpop.f32.mrf.mxu0
        %v1676 = vadd.f32 0.0, %v1675
        %1677 = vmatmul.f32.gmra.mxu0 %v1627
        %v1678 = vpop.f32.mrf.mxu0
        %v1679 = vadd.f32 0.0, %v1678
        %1680 = vdwg.mxu0
        %v1681 = vld [vmem:[%s7] sm:$0xff]
        %v1682 = vld [vmem:[%s7 + $0x8] sm:$0xff]
        %v1683 = vld [vmem:[%s7 + $0x10] sm:$0xff]
        %v1684 = vld [vmem:[%s7 + $0x18] sm:$0xff]
        %v1685 = vmul.f32 %v1653, %v1681
        %v1686 = vmul.f32 %v1676, %v1682
        %v1687 = vmul.f32 %v1656, %v1683
        %v1688 = vmul.f32 %v1679, %v1684
        %v1689 = vadd.f32 %v1685, %v1687
        %v1690 = vrot.slane %v1689, 4
        %v1691 = vadd.f32 %v1689, %v1690
        %v1692 = vrot.slane %v1691, 2
        %v1693 = vadd.f32 %v1691, %v1692
        %v1694 = vrot.slane %v1693, 1
        %v1695 = vadd.f32 %v1693, %v1694
        %v1696 = vadd.f32 %v1686, %v1688
        %v1697 = vrot.slane %v1696, 4
        %v1698 = vadd.f32 %v1696, %v1697
        %v1699 = vrot.slane %v1698, 2
        %v1700 = vadd.f32 %v1698, %v1699
        %v1701 = vrot.slane %v1700, 1
        %v1702 = vadd.f32 %v1700, %v1701
        %v1703 = vld [vmem:[%s8] sm:$0xff]
        %v1704 = vld [vmem:[%s8 + $0x8] sm:$0xff]
        %v1705 = vld [vmem:[%s8 + $0x10] sm:$0xff]
        %v1706 = vld [vmem:[%s8 + $0x18] sm:$0xff]
        %v1707 = vld [vmem:[%s8 + $0x20] sm:$0xff]
        %v1708 = vld [vmem:[%s8 + $0x28] sm:$0xff]
        %v1709 = vld [vmem:[%s8 + $0x30] sm:$0xff]
        %v1710 = vld [vmem:[%s8 + $0x38] sm:$0xff]
        %v1711 = vld [vmem:[%s8 + $0x40] sm:$0xff]
        %v1712 = vld [vmem:[%s8 + $0x48] sm:$0xff]
        %v1713 = vld [vmem:[%s8 + $0x50] sm:$0xff]
        %v1714 = vld [vmem:[%s8 + $0x58] sm:$0xff]
        %v1715 = vld [vmem:[%s8 + $0x60] sm:$0xff]
        %v1716 = vld [vmem:[%s8 + $0x68] sm:$0xff]
        %v1717 = vld [vmem:[%s8 + $0x70] sm:$0xff]
        %v1718 = vld [vmem:[%s8 + $0x78] sm:$0xff]
        %v1719 = vld [vmem:[%s8 + $0x80] sm:$0xff]
        %v1720 = vld [vmem:[%s8 + $0x88] sm:$0xff]
        %v1721 = vld [vmem:[%s8 + $0x90] sm:$0xff]
        %v1722 = vld [vmem:[%s8 + $0x98] sm:$0xff]
        %v1723 = vld [vmem:[%s8 + $0xa0] sm:$0xff]
        %v1724 = vld [vmem:[%s8 + $0xa8] sm:$0xff]
        %v1725 = vld [vmem:[%s8 + $0xb0] sm:$0xff]
        %v1726 = vld [vmem:[%s8 + $0xb8] sm:$0xff]
        %v1727 = vld [vmem:[%s8 + $0xc0] sm:$0xff]
        %v1728 = vld [vmem:[%s8 + $0xc8] sm:$0xff]
        %v1729 = vld [vmem:[%s8 + $0xd0] sm:$0xff]
        %v1730 = vld [vmem:[%s8 + $0xd8] sm:$0xff]
        %v1731 = vld [vmem:[%s8 + $0xe0] sm:$0xff]
        %v1732 = vld [vmem:[%s8 + $0xe8] sm:$0xff]
        %v1733 = vld [vmem:[%s8 + $0xf0] sm:$0xff]
        %v1734 = vld [vmem:[%s8 + $0xf8] sm:$0xff]
        %v1735 = vld [vmem:[%s9] sm:$0x1]
        %1736 = vmatpush.msra.mxu0 %v1718
        %1737 = vmatpush.msra.mxu0 %v1717
        %1738 = vmatpush.msra.mxu0 %v1716
        %1739 = vmatpush.msra.mxu0 %v1715
        %1740 = vmatpush.msra.mxu0 %v1714
        %1741 = vmatpush.msra.mxu0 %v1713
        %1742 = vmatpush.msra.mxu0 %v1712
        %1743 = vmatpush.msra.mxu0 %v1711
        %1744 = vmatpush.msra.mxu0 %v1710
        %1745 = vmatpush.msra.mxu0 %v1709
        %1746 = vmatpush.msra.mxu0 %v1708
        %1747 = vmatpush.msra.mxu0 %v1707
        %1748 = vmatpush.msra.mxu0 %v1706
        %1749 = vmatpush.msra.mxu0 %v1705
        %1750 = vmatpush.msra.mxu0 %v1704
        %1751 = vmatpush.msra.mxu0 %v1703
        %1752 = vmatmul.f32.gmra.mxu0 %v1695
        %v1753 = vpop.f32.mrf.mxu0
        %v1754 = vadd.f32 %v1735, %v1753
        %1755 = vdwg.mxu0
        %1756 = vmatpush.msra.mxu0 %v1734
        %1757 = vmatpush.msra.mxu0 %v1733
        %1758 = vmatpush.msra.mxu0 %v1732
        %1759 = vmatpush.msra.mxu0 %v1731
        %1760 = vmatpush.msra.mxu0 %v1730
        %1761 = vmatpush.msra.mxu0 %v1729
        %1762 = vmatpush.msra.mxu0 %v1728
        %1763 = vmatpush.msra.mxu0 %v1727
        %1764 = vmatpush.msra.mxu0 %v1726
        %1765 = vmatpush.msra.mxu0 %v1725
        %1766 = vmatpush.msra.mxu0 %v1724
        %1767 = vmatpush.msra.mxu0 %v1723
        %1768 = vmatpush.msra.mxu0 %v1722
        %1769 = vmatpush.msra.mxu0 %v1721
        %1770 = vmatpush.msra.mxu0 %v1720
        %1771 = vmatpush.msra.mxu0 %v1719
        %1772 = vmatmul.f32.gmra.mxu0 %v1702
        %v1773 = vpop.f32.mrf.mxu0
        %v1774 = vadd.f32 %v1754, %v1773
        %1775 = vdwg.mxu0
        %v1776 = vmax.f32 %v1774, 0.0
        %v1777 = vld [vmem:[%s10] sm:$0xff]
        %v1778 = vld [vmem:[%s10 + $0x8] sm:$0xff]
        %v1779 = vld [vmem:[%s10 + $0x10] sm:$0xff]
        %v1780 = vld [vmem:[%s10 + $0x18] sm:$0xff]
        %v1781 = vld [vmem:[%s10 + $0x20] sm:$0xff]
        %v1782 = vld [vmem:[%s10 + $0x28] sm:$0xff]
        %v1783 = vld [vmem:[%s10 + $0x30] sm:$0xff]
        %v1784 = vld [vmem:[%s10 + $0x38] sm:$0xff]
        %v1785 = vld [vmem:[%s10 + $0x40] sm:$0xff]
        %v1786 = vld [vmem:[%s10 + $0x48] sm:$0xff]
        %v1787 = vld [vmem:[%s10 + $0x50] sm:$0xff]
        %v1788 = vld [vmem:[%s10 + $0x58] sm:$0xff]
        %v1789 = vld [vmem:[%s10 + $0x60] sm:$0xff]
        %v1790 = vld [vmem:[%s10 + $0x68] sm:$0xff]
        %v1791 = vld [vmem:[%s10 + $0x70] sm:$0xff]
        %v1792 = vld [vmem:[%s11] sm:$0x1]
        %vm1793 = vcmask 982016
        %v1795 = vsel %vm1793, %v1776, 0
        %1797 = vmatpush.msra.mxu0 0.0
        %1798 = vmatpush.msra.mxu0 %v1791
        %1799 = vmatpush.msra.mxu0 %v1790
        %1800 = vmatpush.msra.mxu0 %v1789
        %1801 = vmatpush.msra.mxu0 %v1788
        %1802 = vmatpush.msra.mxu0 %v1787
        %1803 = vmatpush.msra.mxu0 %v1786
        %1804 = vmatpush.msra.mxu0 %v1785
        %1805 = vmatpush.msra.mxu0 %v1784
        %1806 = vmatpush.msra.mxu0 %v1783
        %1807 = vmatpush.msra.mxu0 %v1782
        %1808 = vmatpush.msra.mxu0 %v1781
        %1809 = vmatpush.msra.mxu0 %v1780
        %1810 = vmatpush.msra.mxu0 %v1779
        %1811 = vmatpush.msra.mxu0 %v1778
        %1812 = vmatpush.msra.mxu0 %v1777
        %1813 = vmatmul.f32.gmra.mxu0 %v1795
        %v1814 = vpop.f32.mrf.mxu0
        %v1815 = vadd.f32 %v1792, %v1814
        %1816 = vdwg.mxu0
        %v1817 = vmax.f32 %v1815, 0.0
        %v1818 = vld [vmem:[%s12] sm:$0xff]
        %v1819 = vld [vmem:[%s12 + $0x8] sm:$0xff]
        %v1820 = vld [vmem:[%s12 + $0x10] sm:$0xff]
        %v1821 = vld [vmem:[%s12 + $0x18] sm:$0xff]
        %v1822 = vld [vmem:[%s12 + $0x20] sm:$0xff]
        %v1823 = vld [vmem:[%s12 + $0x28] sm:$0xff]
        %v1824 = vld [vmem:[%s12 + $0x30] sm:$0xff]
        %v1825 = vld [vmem:[%s12 + $0x38] sm:$0xff]
        %v1826 = vld [vmem:[%s12 + $0x40] sm:$0xff]
        %v1827 = vld [vmem:[%s12 + $0x48] sm:$0xff]
        %v1828 = vld [vmem:[%s12 + $0x50] sm:$0xf]
        %v1829 = vld [vmem:[%s13] sm:$0x1]
        %vm1830 = vcmask 687104
        %v1832 = vsel %vm1830, %v1817, 0
        %vm1834 = vcmask 1043456
        %v1836 = vsel %vm1834, %v1828, 0
        %1838 = vmatpush.msra.mxu0 0.0
        %1839 = vmatpush.msra.mxu0 0.0
        %1840 = vmatpush.msra.mxu0 0.0
        %1841 = vmatpush.msra.mxu0 0.0
        %1842 = vmatpush.msra.mxu0 0.0
        %1843 = vmatpush.msra.mxu0 %v1836
        %1844 = vmatpush.msra.mxu0 %v1827
        %1845 = vmatpush.msra.mxu0 %v1826
        %1846 = vmatpush.msra.mxu0 %v1825
        %1847 = vmatpush.msra.mxu0 %v1824
        %1848 = vmatpush.msra.mxu0 %v1823
        %1849 = vmatpush.msra.mxu0 %v1822
        %1850 = vmatpush.msra.mxu0 %v1821
        %1851 = vmatpush.msra.mxu0 %v1820
        %1852 = vmatpush.msra.mxu0 %v1819
        %1853 = vmatpush.msra.mxu0 %v1818
        %1854 = vmatmul.f32.gmra.mxu0 %v1832
        %v1855 = vpop.f32.mrf.mxu0
        %v1856 = vadd.f32 %v1829, %v1855
        %1857 = vdwg.mxu0
        %vm1858 = vcmask 73728
        %1859 = vst.msk [vmem:[%s457] sm:$0x1] %vm1858, %v1856
        %s1860 = sand.u32 %s335, 1
        %s1861 = scalar_lea.sflag [#allocation5], %s1860
        %s1862 = sand.u32 %s335, 1
        %s1863 = scalar_lea.vmem [#allocation4], %s1862
        // Predicated region
        $region77: #{lenet_forward.1} parent=75 // pred_check
          %p1864 = pneg %p345
        $region78: #{lenet_forward.1} parent=75 // pred_check_branch
          %1866 = sbr.rel (%p1864) target = $region80
        $region79: #{lenet_forward.1} parent=75 // pred_region
          %1868 = vsyncadd %s1861, 0
          %s1869 = scalar_lea.hbm %s14, %s28
          %s1871 = sshll.u32 %s1863, 4
          %s1872 = int_to_ptr.vmem [resolvable:$true] %s1871
          %s1873 = sshll.u32 %s1869, 4
          %s1874 = int_to_ptr.hbm [resolvable:$true] %s1873
          %1876 = dma.vmem_to_hbm [thread:$0]  %s1872, 16, %s1874, %s1861
        $region80: #{lenet_forward.1} parent=75 // pred_fallthru
          _
      $region76: #{lenet_forward.1} parent=5 // pred_fallthru
        _
      %p1877 = scmp.le.s32.totalorder 2, %s23
      // Predicated region
      $region81: #{lenet_forward.1} parent=5 // pred_check
        %p1878 = pneg %p1877
      $region82: #{lenet_forward.1} parent=5 // pred_check_branch
        %1880 = sbr.rel (%p1878) target = $region84
      $region83: #{lenet_forward.1} parent=5 // pred_region
        %s1881 = ssub.s32 %s23, 2
        // Predicated region
        $region85: #{lenet_forward.1} parent=83 // pred_check
          %p1882 = pneg %p351
        $region86: #{lenet_forward.1} parent=83 // pred_check_branch
          %1884 = sbr.rel (%p1882) target = $region88
        $region87: #{lenet_forward.1} parent=83 // pred_region
          %s1885 = sand.u32 %s336, 1
          %s1886 = scalar_lea.sflag [#allocation5], %s1885
          %s1887 = sand.u32 %s336, 1
          %s1888 = scalar_lea.vmem [#allocation4], %s1887
          %1890 = dma.done %s1886, 16
        $region88: #{lenet_forward.1} parent=83 // pred_fallthru
          _
      $region84: #{lenet_forward.1} parent=5 // pred_fallthru
        _
    $region6: #{lenet_forward.1} parent=1 // loop_footer
      %s27 = sadd.s32 1, %s23
    $region7: #{lenet_forward.1} parent=1 // loop_footer_branch
      %22 = sbr.rel target = $region3
    $region8: #{lenet_forward.1} parent=1 // loop_exit
      _
    %1891 = vsyncpa [#allocation5], 1
    %s1892 = scalar_lea.sflag [#allocation5], 1
    %1893 = vsyncpa %s1892, 1

</llo_original>
